<compile_context>
chip_gen: v7x
topology: tpu7x:2x2x1
jax: 0.10.0
libtpu: 0.0.40
codegen_flags: <defaults>
</compile_context>

<pallas_src>
import jax
import jax.numpy as jnp
from jax import lax
from jax.experimental import pallas as pl
from jax.experimental.pallas import tpu as pltpu

EPS = 1e-5
_BF16 = jnp.bfloat16


# ---------------------------------------------------------------------------
# helpers used inside the kernel
# ---------------------------------------------------------------------------
def _layer_norm(x, gamma, beta):
    mu = jnp.mean(x, axis=-1, keepdims=True)
    var = jnp.mean((x - mu) ** 2, axis=-1, keepdims=True)
    return (x - mu) * lax.rsqrt(var + EPS) * gamma + beta


def _softmax(s):
    m = jnp.max(s, axis=-1, keepdims=True)
    e = jnp.exp(s - m)
    return e * pl.reciprocal(jnp.sum(e, axis=-1, keepdims=True), approx=True)


# ---------------------------------------------------------------------------
# fused Decoder kernel: all layers + final norm + projection
# ---------------------------------------------------------------------------
def fused_decoder_kernel(
    x_ref, cross_ref, wqkv_ref, wmisc_ref, wkvc_ref,
    w1_ref, b1_ref, w2_ref, b2_ref, ln_ref,
    fnorm_ref, pw_ref, pb_ref,
    out_ref, omega_ref, theta_ref,
    xres_ref,
):
    li = pl.program_id(1)
    n_layers = pl.num_programs(1)

    @pl.when(li == 0)
    def _init():
        xres_ref[...] = x_ref[...]
        omega_ref[...] = jnp.zeros_like(omega_ref)
        theta_ref[...] = jnp.zeros_like(theta_ref)

    bblk, L, D = xres_ref.shape
    S = cross_ref.shape[1]

    xf = xres_ref[...].reshape(bblk * L, D)          # residual stream, f32
    crb = cross_ref[...].reshape(bblk * S, D)        # already bf16
    ln = ln_ref[0]                                   # (6, D) f32: g1 b1 g2 b2 g3 b3

    # ---- self attention (single head; packed Q|K|V, scale folded into Wq) ---
    xb = xf.astype(_BF16)                            # single cast for this stage
    qkv = jnp.dot(xb, wqkv_ref[0], preferred_element_type=jnp.float32)
    q = qkv[:, 0 * D:1 * D].reshape(bblk, L, D).astype(_BF16)
    k = qkv[:, 1 * D:2 * D].reshape(bblk, L, D).astype(_BF16)
    v = qkv[:, 2 * D:3 * D].reshape(bblk, L, D).astype(_BF16)
    s = jnp.einsum("bqd,bkd->bqk", q, k, preferred_element_type=jnp.float32)
    a_self = _softmax(s)                             # (bblk, L, L) f32
    ctx = jnp.einsum("bqk,bkd->bqd", a_self.astype(_BF16), v,
                     preferred_element_type=jnp.float32)
    attn_out = jnp.dot(ctx.reshape(bblk * L, D).astype(_BF16), wmisc_ref[0, 0],
                       preferred_element_type=jnp.float32)
    xf = _layer_norm(xf + attn_out, ln[0:1], ln[1:2])

    # ---- cross attention (packed Kc|Vc, scale folded into Wq_cross) ---------
    xb = xf.astype(_BF16)
    qc = jnp.dot(xb, wmisc_ref[0, 1], preferred_element_type=jnp.float32)
    qc = qc.reshape(bblk, L, D).astype(_BF16)
    kvc = jnp.dot(crb, wkvc_ref[0], preferred_element_type=jnp.float32)
    kc = kvc[:, 0 * D:1 * D].reshape(bblk, S, D).astype(_BF16)
    vc = kvc[:, 1 * D:2 * D].reshape(bblk, S, D).astype(_BF16)
    s = jnp.einsum("bqd,bkd->bqk", qc, kc, preferred_element_type=jnp.float32)
    a_cross = _softmax(s)                            # (bblk, L, S) f32
    ctx = jnp.einsum("bqk,bkd->bqd", a_cross.astype(_BF16), vc,
                     preferred_element_type=jnp.float32)
    attn_out = jnp.dot(ctx.reshape(bblk * L, D).astype(_BF16), wmisc_ref[0, 2],
                       preferred_element_type=jnp.float32)
    xf = _layer_norm(xf + attn_out, ln[2:3], ln[3:4])

    # ---- feed forward -------------------------------------------------------
    xb = xf.astype(_BF16)
    h = jnp.maximum(jnp.dot(xb, w1_ref[0], preferred_element_type=jnp.float32)
                    + b1_ref[0], 0.0)
    ff = jnp.dot(h.astype(_BF16), w2_ref[0], preferred_element_type=jnp.float32)
    xf = _layer_norm(xf + ff + b2_ref[0], ln[4:5], ln[5:6])

    xres_ref[...] = xf.reshape(bblk, L, D)

    # ---- penalties: one slot per layer in a single resident (8,128) tile ----
    inv_self = 1.0 / float(bblk * L * L)
    inv_cross = 1.0 / float(bblk * L * S)
    slot = (lax.broadcasted_iota(jnp.int32, (8, 128), 0) * 128
            + lax.broadcasted_iota(jnp.int32, (8, 128), 1))
    omega_ref[0] = omega_ref[0] + jnp.where(
        slot == li, jnp.sum(a_self * a_self) * inv_self, 0.0)
    theta_ref[0] = theta_ref[0] + jnp.where(
        slot == li, jnp.sum(a_cross * a_cross) * inv_cross, 0.0)

    # ---- final LayerNorm + projection, fused into the last layer ------------
    @pl.when(li == n_layers - 1)
    def _finalize():
        fn = fnorm_ref[...]                          # (2, D)
        xn = _layer_norm(xf, fn[0:1], fn[1:2])
        out = jnp.dot(xn.astype(_BF16), pw_ref[...],
                      preferred_element_type=jnp.float32) + pb_ref[...]
        out_ref[...] = out.reshape(bblk, L, -1).astype(out_ref.dtype)


# ---------------------------------------------------------------------------
# wrapper: generation-aware sizing + VMEM budgeting
# ---------------------------------------------------------------------------
def _tpu_generation():
    try:
        kind = jax.devices()[0].device_kind.lower()
    except Exception:
        return "v6e"
    if "v7" in kind or "7x" in kind:
        return "v7x"
    if "v6" in kind:
        return "v6e"
    if "v5 lite" in kind or "v5e" in kind or "v5lite" in kind:
        return "v5e"
    return "v6e"


def _vmem_bytes_estimate(bblk, L, S, D, d_ff, c_pad):
    rows = bblk * L
    # per-layer streamed weights (bf16) + biases/LN (f32), double-buffered
    w_layer = (8 * D * D + 2 * D * d_ff) * 2 + (d_ff + D) * 4 + 6 * D * 4
    est = 2 * w_layer
    est += bblk * L * D * 4                 # x (single-buffered)
    est += bblk * S * D * 2                 # cross bf16 (single-buffered)
    est += 2 * bblk * L * c_pad * 2         # out bf16, double-buffered
    est += bblk * L * D * 4                 # xres scratch
    est += D * c_pad * 2 + 2 * D * 4 + c_pad * 4   # projection + final norm
    # transient activations (rough upper bound)
    est += rows * 3 * D * (4 + 2)           # qkv f32 + bf16 copies
    est += bblk * L * (L + S) * 6           # attention scores f32 + bf16
    est += rows * D * (4 + 2) * 2           # contexts / attention outputs
    est += rows * d_ff * (4 + 2)            # FFN hidden
    est += 4 * 8 * 128 * 4                  # penalty accumulators
    return est


def _pick_bblk(B, L, target_rows, max_bblk, fits):
    divs = [d for d in range(1, B + 1) if B % d == 0 and d <= max_bblk]
    if not divs:
        divs = [1]
    for d in divs:                          # smallest block reaching the target
        if d * L >= target_rows and fits(d):
            return d
    for d in reversed(divs):                # else the largest that fits VMEM
        if fits(d):
            return d
    return divs[0]


def _spec(shape, index_map, single_buffered=False):
    """BlockSpec with optional single-buffering; falls back if unsupported."""
    if single_buffered:
        try:
            return pl.BlockSpec(shape, index_map, pipeline_mode=pl.Buffered(1))
        except Exception:
            pass
    return pl.BlockSpec(shape, index_map)


def decoder_forward(x, cross, params, x_mask=None, cross_mask=None):
    # TODO(synk): mask handling of the original Deformer layers is unavailable.
    if x_mask is not None or cross_mask is not None:
        raise NotImplementedError("x_mask / cross_mask are not supported")

    B, L, D = x.shape
    S = cross.shape[1]
    aw = params["attn_w"]                    # (nl, 8, D, D): wqs wks wvs wos wqc wkc wvc woc
    n_layers = aw.shape[0]
    d_ff = params["w1"].shape[-1]
    c_out = params["proj_w"].shape[-1]
    c_pad = ((c_out + 127) // 128) * 128     # lane-dense projection output
    assert n_layers <= 8 * 128

    # ---- generation-aware sizing --------------------------------------------
    gen = _tpu_generation()
    if gen == "v5e":
        target_rows, vmem_limit = 256, 96 << 20
    elif gen == "v7x":
        target_rows, vmem_limit = 640, 48 << 20
    else:  # v6e / default
        target_rows, vmem_limit = 640, 96 << 20

    max_bblk = B
    if gen == "v7x" and B >= 2:
        max_bblk = B // 2                    # keep both TensorCores busy

    budget = int(vmem_limit * 0.85)
    bblk = _pick_bblk(B, L, target_rows, max_bblk,
                      lambda d: _vmem_bytes_estimate(d, L, S, D, d_ff, c_pad) <= budget)
    n_bblk = B // bblk

    # ---- weight packing: wide QKV / KcVc matmuls, scale folded into Wq ------
    scale = 1.0 / float(D) ** 0.5
    w_qkv = jnp.concatenate(
        [aw[:, 0] * scale, aw[:, 1], aw[:, 2]], axis=-1).astype(_BF16)   # (nl, D, 3D)
    w_misc = jnp.stack(
        [aw[:, 3], aw[:, 4] * scale, aw[:, 7]], axis=1).astype(_BF16)    # (nl, 3, D, D)
    w_kvc = jnp.concatenate([aw[:, 5], aw[:, 6]], axis=-1).astype(_BF16)  # (nl, D, 2D)
    w1 = params["w1"].astype(_BF16)
    w2 = params["w2"].astype(_BF16)
    cross_bf = cross.astype(_BF16)
    proj_w = jnp.zeros((D, c_pad), jnp.float32).at[:, :c_out].set(
        params["proj_w"]).astype(_BF16)
    proj_b = jnp.zeros((1, c_pad), jnp.float32).at[0, :c_out].set(params["proj_b"])

    out, om, th = pl.pallas_call(
        fused_decoder_kernel,
        out_shape=(
            jax.ShapeDtypeStruct((B, L, c_pad), _BF16),
            jax.ShapeDtypeStruct((n_bblk, 8, 128), jnp.float32),
            jax.ShapeDtypeStruct((n_bblk, 8, 128), jnp.float32),
        ),
        grid=(n_bblk, n_layers),
        in_specs=[
            _spec((bblk, L, D), lambda b, l: (b, 0, 0), single_buffered=True),   # x
            _spec((bblk, S, D), lambda b, l: (b, 0, 0), single_buffered=True),   # cross
            pl.BlockSpec((1, D, 3 * D), lambda b, l: (l, 0, 0)),                 # Wq|Wk|Wv
            pl.BlockSpec((1, 3, D, D), lambda b, l: (l, 0, 0, 0)),               # Wo_s,Wq_c,Wo_c
            pl.BlockSpec((1, D, 2 * D), lambda b, l: (l, 0, 0)),                 # Wk_c|Wv_c
            pl.BlockSpec((1, D, d_ff), lambda b, l: (l, 0, 0)),                  # w1
            pl.BlockSpec((1, 1, d_ff), lambda b, l: (l, 0, 0)),                  # b1
            pl.BlockSpec((1, d_ff, D), lambda b, l: (l, 0, 0)),                  # w2
            pl.BlockSpec((1, 1, D), lambda b, l: (l, 0, 0)),                     # b2
            pl.BlockSpec((1, 6, D), lambda b, l: (l, 0, 0)),                     # LN params
            _spec((2, D), lambda b, l: (0, 0), single_buffered=True),            # final norm
            _spec((D, c_pad), lambda b, l: (0, 0), single_buffered=True),        # proj W
            _spec((1, c_pad), lambda b, l: (0, 0), single_buffered=True),        # proj b
        ],
        out_specs=[
            pl.BlockSpec((bblk, L, c_pad), lambda b, l: (b, 0, 0)),
            pl.BlockSpec((1, 8, 128), lambda b, l: (b, 0, 0)),
            pl.BlockSpec((1, 8, 128), lambda b, l: (b, 0, 0)),
        ],
        scratch_shapes=[pltpu.VMEM((bblk, L, D), jnp.float32)],
        compiler_params=pltpu.CompilerParams(
            dimension_semantics=("parallel", "arbitrary"),
            vmem_limit_bytes=vmem_limit),
    )(x, cross_bf, w_qkv, w_misc, w_kvc, w1, params["b1"], w2, params["b2"],
      params["ln"], params["norm"], proj_w, proj_b)

    out = out[..., :c_out].astype(jnp.float32)
    om_l = om.reshape(n_bblk, 8 * 128)[:, :n_layers].mean(axis=0)
    th_l = th.reshape(n_bblk, 8 * 128)[:, :n_layers].mean(axis=0)
    omegas_penalties = [om_l[i] for i in range(n_layers)]
    thetas_penalties = [th_l[i] for i in range(n_layers)]
    return out, omegas_penalties, thetas_penalties


# ---------------------------------------------------------------------------
# deterministic parameter init (stacked per-layer weights)
# ---------------------------------------------------------------------------
def init_params(key, n_layers, d_model, d_ff, c_out):
    k_attn, k_w1, k_w2, k_proj = jax.random.split(key, 4)
    sc = 0.05
    ones = jnp.ones((d_model,), jnp.float32)
    zeros = jnp.zeros((d_model,), jnp.float32)
    ln_one = jnp.stack([ones, zeros, ones, zeros, ones, zeros])       # (6, D)
    return {
        # order: wqs, wks, wvs, wos, wqc, wkc, wvc, woc
        "attn_w": sc * jax.random.normal(
            k_attn, (n_layers, 8, d_model, d_model), jnp.float32),
        "w1": sc * jax.random.normal(k_w1, (n_layers, d_model, d_ff), jnp.float32),
        "b1": jnp.zeros((n_layers, 1, d_ff), jnp.float32),
        "w2": sc * jax.random.normal(k_w2, (n_layers, d_ff, d_model), jnp.float32),
        "b2": jnp.zeros((n_layers, 1, d_model), jnp.float32),
        "ln": jnp.tile(ln_one[None], (n_layers, 1, 1)),               # (nl, 6, D)
        "norm": jnp.stack([ones, zeros]),                             # (2, D)
        "proj_w": sc * jax.random.normal(k_proj, (d_model, c_out), jnp.float32),
        "proj_b": jnp.zeros((c_out,), jnp.float32),
    }


if __name__ == "__main__":
    B, L, S, D, D_FF, C_OUT, N_LAYERS = 2, 8, 8, 32, 64, 8, 2

    key = jax.random.PRNGKey(0)
    kx, kc, kw = jax.random.split(key, 3)
    x = jax.random.normal(kx, (B, L, D), jnp.float32)
    cross = jax.random.normal(kc, (B, S, D), jnp.float32)
    params = init_params(kw, N_LAYERS, D, D_FF, C_OUT)

    fwd = jax.jit(decoder_forward)
    out, omegas_penalties, thetas_penalties = fwd(x, cross, params)
    jax.block_until_ready(out)
    for p in omegas_penalties + thetas_penalties:
        jax.block_until_ready(p)

    assert out.shape == (B, L, C_OUT)
    assert len(omegas_penalties) == N_LAYERS
    assert len(thetas_penalties) == N_LAYERS
    assert bool(jnp.all(jnp.isfinite(out)))
    assert all(bool(jnp.isfinite(p)) for p in omegas_penalties + thetas_penalties)
    print("KERNEL_OK")
</pallas_src>

<mosaic_0001>
module attributes {stable_mosaic.version = 11 : i64} {
  func.func @fused_decoder_kernel(%arg0: i32, %arg1: i32, %arg2: memref<2x8x32xf32, #tpu.memory_space<vmem>>, %arg3: memref<2x8x32xbf16, #tpu.memory_space<vmem>>, %arg4: memref<1x32x96xbf16, #tpu.memory_space<vmem>>, %arg5: memref<1x3x32x32xbf16, #tpu.memory_space<vmem>>, %arg6: memref<1x32x64xbf16, #tpu.memory_space<vmem>>, %arg7: memref<1x32x64xbf16, #tpu.memory_space<vmem>>, %arg8: memref<1x1x64xf32, #tpu.memory_space<vmem>>, %arg9: memref<1x64x32xbf16, #tpu.memory_space<vmem>>, %arg10: memref<1x1x32xf32, #tpu.memory_space<vmem>>, %arg11: memref<1x6x32xf32, #tpu.memory_space<vmem>>, %arg12: memref<2x32xf32, #tpu.memory_space<vmem>>, %arg13: memref<32x128xbf16, #tpu.memory_space<vmem>>, %arg14: memref<1x128xf32, #tpu.memory_space<vmem>>, %arg15: memref<2x8x128xbf16, #tpu.memory_space<vmem>>, %arg16: memref<1x8x128xf32, #tpu.memory_space<vmem>>, %arg17: memref<1x8x128xf32, #tpu.memory_space<vmem>>, %arg18: memref<2x8x32xf32, #tpu.memory_space<vmem>>) attributes {dimension_semantics = [#tpu.dimension_semantics<parallel>, #tpu.dimension_semantics<arbitrary>], iteration_bounds = array<i64: 1, 2>, scalar_prefetch = 0 : i64, scratch_operands = 1 : i64, tpu.core_type = #tpu.core_type<tc>, window_params = [{pipeline_mode = #tpu.pipeline_mode<synchronous>, transform_indices = @transform_0, window_bounds = array<i64: 2, 8, 32>}, {pipeline_mode = #tpu.pipeline_mode<synchronous>, transform_indices = @transform_1, window_bounds = array<i64: 2, 8, 32>}, {transform_indices = @transform_2, window_bounds = array<i64: 1, 32, 96>}, {transform_indices = @transform_3, window_bounds = array<i64: 1, 3, 32, 32>}, {transform_indices = @transform_4, window_bounds = array<i64: 1, 32, 64>}, {transform_indices = @transform_5, window_bounds = array<i64: 1, 32, 64>}, {transform_indices = @transform_6, window_bounds = array<i64: 1, 1, 64>}, {transform_indices = @transform_7, window_bounds = array<i64: 1, 64, 32>}, {transform_indices = @transform_8, window_bounds = array<i64: 1, 1, 32>}, {transform_indices = @transform_9, window_bounds = array<i64: 1, 6, 32>}, {pipeline_mode = #tpu.pipeline_mode<synchronous>, transform_indices = @transform_10, window_bounds = array<i64: 2, 32>}, {pipeline_mode = #tpu.pipeline_mode<synchronous>, transform_indices = @transform_11, window_bounds = array<i64: 32, 128>}, {pipeline_mode = #tpu.pipeline_mode<synchronous>, transform_indices = @transform_12, window_bounds = array<i64: 1, 128>}, {transform_indices = @transform_13, window_bounds = array<i64: 2, 8, 128>}, {transform_indices = @transform_14, window_bounds = array<i64: 1, 8, 128>}, {transform_indices = @transform_15, window_bounds = array<i64: 1, 8, 128>}]} {
    %c0_i32 = arith.constant 0 : i32
    %0 = arith.cmpi eq, %arg1, %c0_i32 : i32
    %1 = arith.extui %0 : i1 to i32
    %c0_i32_0 = arith.constant 0 : i32
    %2 = arith.cmpi ne, %1, %c0_i32_0 : i32
    scf.if %2 {
      %c0_89 = arith.constant 0 : index
      %c0_90 = arith.constant 0 : index
      %c0_91 = arith.constant 0 : index
      %210 = vector.load %arg2[%c0_89, %c0_90, %c0_91] : memref<2x8x32xf32, #tpu.memory_space<vmem>>, vector<2x8x32xf32>
      %c0_92 = arith.constant 0 : index
      %c0_93 = arith.constant 0 : index
      %c0_94 = arith.constant 0 : index
      %211 = vector.load %arg18[%c0_92, %c0_93, %c0_94] : memref<2x8x32xf32, #tpu.memory_space<vmem>>, vector<2x8x32xf32>
      tpu.vector_store %arg18[%c0_92, %c0_93, %c0_94], %210 {strides = array<i32>} : memref<2x8x32xf32, #tpu.memory_space<vmem>>, vector<2x8x32xf32>,
      %cst_95 = arith.constant 0.000000e+00 : f32
      %212 = vector.broadcast %cst_95 : f32 to vector<1x8x128xf32>
      %c0_96 = arith.constant 0 : index
      %c0_97 = arith.constant 0 : index
      %c0_98 = arith.constant 0 : index
      %213 = vector.load %arg16[%c0_96, %c0_97, %c0_98] : memref<1x8x128xf32, #tpu.memory_space<vmem>>, vector<1x8x128xf32>
      tpu.vector_store %arg16[%c0_96, %c0_97, %c0_98], %212 {strides = array<i32>} : memref<1x8x128xf32, #tpu.memory_space<vmem>>, vector<1x8x128xf32>,
      %cst_99 = arith.constant 0.000000e+00 : f32
      %214 = vector.broadcast %cst_99 : f32 to vector<1x8x128xf32>
      %c0_100 = arith.constant 0 : index
      %c0_101 = arith.constant 0 : index
      %c0_102 = arith.constant 0 : index
      %215 = vector.load %arg17[%c0_100, %c0_101, %c0_102] : memref<1x8x128xf32, #tpu.memory_space<vmem>>, vector<1x8x128xf32>
      tpu.vector_store %arg17[%c0_100, %c0_101, %c0_102], %214 {strides = array<i32>} : memref<1x8x128xf32, #tpu.memory_space<vmem>>, vector<1x8x128xf32>,
    } else {
    }
    %c0 = arith.constant 0 : index
    %c0_1 = arith.constant 0 : index
    %c0_2 = arith.constant 0 : index
    %3 = vector.load %arg18[%c0, %c0_1, %c0_2] : memref<2x8x32xf32, #tpu.memory_space<vmem>>, vector<2x8x32xf32>
    %4 = vector.shape_cast %3 : vector<2x8x32xf32> to vector<16x32xf32>
    %c0_3 = arith.constant 0 : index
    %c0_4 = arith.constant 0 : index
    %c0_5 = arith.constant 0 : index
    %5 = vector.load %arg3[%c0_3, %c0_4, %c0_5] : memref<2x8x32xbf16, #tpu.memory_space<vmem>>, vector<2x8x32xbf16>
    %6 = vector.shape_cast %5 : vector<2x8x32xbf16> to vector<16x32xbf16>
    %c0_6 = arith.constant 0 : index
    %c0_7 = arith.constant 0 : index
    %c0_8 = arith.constant 0 : index
    %7 = vector.load %arg11[%c0_6, %c0_7, %c0_8] : memref<1x6x32xf32, #tpu.memory_space<vmem>>, vector<1x6x32xf32>
    %8 = vector.shape_cast %7 : vector<1x6x32xf32> to vector<6x32xf32>
    %9 = arith.truncf %4 : vector<16x32xf32> to vector<16x32xbf16>
    %c0_9 = arith.constant 0 : index
    %c0_10 = arith.constant 0 : index
    %c0_11 = arith.constant 0 : index
    %10 = vector.load %arg4[%c0_9, %c0_10, %c0_11] : memref<1x32x96xbf16, #tpu.memory_space<vmem>>, vector<1x32x96xbf16>
    %11 = vector.shape_cast %10 : vector<1x32x96xbf16> to vector<32x96xbf16>
    %cst = arith.constant dense<0.000000e+00> : vector<16x96xf32>
    %12 = tpu.matmul %9, %11, %cst {dimension_numbers = #tpu.dot_dimension_numbers<[1], [0], [0], [1], [0, 0, 1, 1], [], []>} : vector<16x32xbf16>, vector<32x96xbf16>, vector<16x96xf32> -> vector<16x96xf32>
    %13 = vector.extract_strided_slice %12 {offsets = [0, 0], sizes = [16, 32], strides = [1, 1]} : vector<16x96xf32> to vector<16x32xf32>
    %14 = vector.shape_cast %13 : vector<16x32xf32> to vector<2x8x32xf32>
    %15 = arith.truncf %14 : vector<2x8x32xf32> to vector<2x8x32xbf16>
    %16 = vector.extract_strided_slice %12 {offsets = [0, 32], sizes = [16, 32], strides = [1, 1]} : vector<16x96xf32> to vector<16x32xf32>
    %17 = vector.shape_cast %16 : vector<16x32xf32> to vector<2x8x32xf32>
    %18 = arith.truncf %17 : vector<2x8x32xf32> to vector<2x8x32xbf16>
    %19 = vector.extract_strided_slice %12 {offsets = [0, 64], sizes = [16, 32], strides = [1, 1]} : vector<16x96xf32> to vector<16x32xf32>
    %20 = vector.shape_cast %19 : vector<16x32xf32> to vector<2x8x32xf32>
    %21 = arith.truncf %20 : vector<2x8x32xf32> to vector<2x8x32xbf16>
    "tpu.trace_start"() <{level = 10 : i32, message = "bqd,bkd->bqk"}> : () -> ()
    %cst_12 = arith.constant dense<0.000000e+00> : vector<2x8x8xf32>
    %22 = tpu.matmul %15, %18, %cst_12 {dimension_numbers = #tpu.dot_dimension_numbers<[2], [2], [1], [1], [0, 0, 0, 1, 1, 1], [0], [0]>} : vector<2x8x32xbf16>, vector<2x8x32xbf16>, vector<2x8x8xf32> -> vector<2x8x8xf32>
    "tpu.trace_stop"() : () -> ()
    %cst_13 = arith.constant dense<0xFF800000> : vector<2x8xf32>
    %23 = vector.multi_reduction <maximumf>, %22, %cst_13 [2] : vector<2x8x8xf32> to vector<2x8xf32>
    %24 = vector.shape_cast %23 : vector<2x8xf32> to vector<2x8x1xf32>
    %25 = vector.broadcast %24 : vector<2x8x1xf32> to vector<2x8x8xf32>
    %26 = arith.subf %22, %25 : vector<2x8x8xf32>
    %27 = math.exp %26 : vector<2x8x8xf32>
    %cst_14 = arith.constant dense<0.000000e+00> : vector<2x8xf32>
    %28 = vector.multi_reduction <add>, %27, %cst_14 [2] : vector<2x8x8xf32> to vector<2x8xf32>
    %29 = vector.shape_cast %28 : vector<2x8xf32> to vector<2x8x1xf32>
    %30 = tpu.reciprocal %29 {approx = true} : vector<2x8x1xf32> -> vector<2x8x1xf32>
    %31 = vector.broadcast %30 : vector<2x8x1xf32> to vector<2x8x8xf32>
    %32 = arith.mulf %27, %31 : vector<2x8x8xf32>
    %33 = arith.truncf %32 : vector<2x8x8xf32> to vector<2x8x8xbf16>
    "tpu.trace_start"() <{level = 10 : i32, message = "bqk,bkd->bqd"}> : () -> ()
    %cst_15 = arith.constant dense<0.000000e+00> : vector<2x8x32xf32>
    %34 = tpu.matmul %33, %21, %cst_15 {dimension_numbers = #tpu.dot_dimension_numbers<[2], [1], [1], [2], [0, 0, 0, 1, 1, 2], [0], [0]>} : vector<2x8x8xbf16>, vector<2x8x32xbf16>, vector<2x8x32xf32> -> vector<2x8x32xf32>
    "tpu.trace_stop"() : () -> ()
    %35 = vector.shape_cast %34 : vector<2x8x32xf32> to vector<16x32xf32>
    %36 = arith.truncf %35 : vector<16x32xf32> to vector<16x32xbf16>
    %c0_16 = arith.constant 0 : index
    %c0_17 = arith.constant 0 : index
    %c0_18 = arith.constant 0 : index
    %c0_19 = arith.constant 0 : index
    %37 = vector.load %arg5[%c0_16, %c0_17, %c0_18, %c0_19] : memref<1x3x32x32xbf16, #tpu.memory_space<vmem>>, vector<1x1x32x32xbf16>
    %38 = vector.shape_cast %37 : vector<1x1x32x32xbf16> to vector<32x32xbf16>
    %cst_20 = arith.constant dense<0.000000e+00> : vector<16x32xf32>
    %39 = tpu.matmul %36, %38, %cst_20 {dimension_numbers = #tpu.dot_dimension_numbers<[1], [0], [0], [1], [0, 0, 1, 1], [], []>} : vector<16x32xbf16>, vector<32x32xbf16>, vector<16x32xf32> -> vector<16x32xf32>
    %40 = arith.addf %4, %39 : vector<16x32xf32>
    %41 = vector.extract_strided_slice %8 {offsets = [0, 0], sizes = [1, 32], strides = [1, 1]} : vector<6x32xf32> to vector<1x32xf32>
    %42 = vector.extract_strided_slice %8 {offsets = [1, 0], sizes = [1, 32], strides = [1, 1]} : vector<6x32xf32> to vector<1x32xf32>
    %cst_21 = arith.constant dense<0.000000e+00> : vector<16xf32>
    %43 = vector.multi_reduction <add>, %40, %cst_21 [1] : vector<16x32xf32> to vector<16xf32>
    %44 = vector.shape_cast %43 : vector<16xf32> to vector<16x1xf32>
    %cst_22 = arith.constant 3.200000e+01 : f32
    %45 = vector.broadcast %cst_22 : f32 to vector<16x1xf32>
    %46 = arith.divf %44, %45 : vector<16x1xf32>
    %47 = vector.broadcast %46 : vector<16x1xf32> to vector<16x32xf32>
    %48 = arith.subf %40, %47 : vector<16x32xf32>
    %49 = arith.mulf %48, %48 : vector<16x32xf32>
    %cst_23 = arith.constant dense<0.000000e+00> : vector<16xf32>
    %50 = vector.multi_reduction <add>, %49, %cst_23 [1] : vector<16x32xf32> to vector<16xf32>
    %51 = vector.shape_cast %50 : vector<16xf32> to vector<16x1xf32>
    %cst_24 = arith.constant 3.200000e+01 : f32
    %52 = vector.broadcast %cst_24 : f32 to vector<16x1xf32>
    %53 = arith.divf %51, %52 : vector<16x1xf32>
    %54 = vector.broadcast %46 : vector<16x1xf32> to vector<16x32xf32>
    %55 = arith.subf %40, %54 : vector<16x32xf32>
    %cst_25 = arith.constant 9.99999974E-6 : f32
    %56 = vector.broadcast %cst_25 : f32 to vector<16x1xf32>
    %57 = arith.addf %53, %56 : vector<16x1xf32>
    %58 = math.rsqrt %57 : vector<16x1xf32>
    %59 = vector.broadcast %58 : vector<16x1xf32> to vector<16x32xf32>
    %60 = arith.mulf %55, %59 : vector<16x32xf32>
    %61 = vector.broadcast %41 : vector<1x32xf32> to vector<16x32xf32>
    %62 = arith.mulf %60, %61 : vector<16x32xf32>
    %63 = vector.broadcast %42 : vector<1x32xf32> to vector<16x32xf32>
    %64 = arith.addf %62, %63 : vector<16x32xf32>
    %65 = arith.truncf %64 : vector<16x32xf32> to vector<16x32xbf16>
    %c0_26 = arith.constant 0 : index
    %c1 = arith.constant 1 : index
    %c0_27 = arith.constant 0 : index
    %c0_28 = arith.constant 0 : index
    %66 = vector.load %arg5[%c0_26, %c1, %c0_27, %c0_28] : memref<1x3x32x32xbf16, #tpu.memory_space<vmem>>, vector<1x1x32x32xbf16>
    %67 = vector.shape_cast %66 : vector<1x1x32x32xbf16> to vector<32x32xbf16>
    %cst_29 = arith.constant dense<0.000000e+00> : vector<16x32xf32>
    %68 = tpu.matmul %65, %67, %cst_29 {dimension_numbers = #tpu.dot_dimension_numbers<[1], [0], [0], [1], [0, 0, 1, 1], [], []>} : vector<16x32xbf16>, vector<32x32xbf16>, vector<16x32xf32> -> vector<16x32xf32>
    %69 = vector.shape_cast %68 : vector<16x32xf32> to vector<2x8x32xf32>
    %70 = arith.truncf %69 : vector<2x8x32xf32> to vector<2x8x32xbf16>
    %c0_30 = arith.constant 0 : index
    %c0_31 = arith.constant 0 : index
    %c0_32 = arith.constant 0 : index
    %71 = vector.load %arg6[%c0_30, %c0_31, %c0_32] : memref<1x32x64xbf16, #tpu.memory_space<vmem>>, vector<1x32x64xbf16>
    %72 = vector.shape_cast %71 : vector<1x32x64xbf16> to vector<32x64xbf16>
    %cst_33 = arith.constant dense<0.000000e+00> : vector<16x64xf32>
    %73 = tpu.matmul %6, %72, %cst_33 {dimension_numbers = #tpu.dot_dimension_numbers<[1], [0], [0], [1], [0, 0, 1, 1], [], []>} : vector<16x32xbf16>, vector<32x64xbf16>, vector<16x64xf32> -> vector<16x64xf32>
    %74 = vector.extract_strided_slice %73 {offsets = [0, 0], sizes = [16, 32], strides = [1, 1]} : vector<16x64xf32> to vector<16x32xf32>
    %75 = vector.shape_cast %74 : vector<16x32xf32> to vector<2x8x32xf32>
    %76 = arith.truncf %75 : vector<2x8x32xf32> to vector<2x8x32xbf16>
    %77 = vector.extract_strided_slice %73 {offsets = [0, 32], sizes = [16, 32], strides = [1, 1]} : vector<16x64xf32> to vector<16x32xf32>
    %78 = vector.shape_cast %77 : vector<16x32xf32> to vector<2x8x32xf32>
    %79 = arith.truncf %78 : vector<2x8x32xf32> to vector<2x8x32xbf16>
    "tpu.trace_start"() <{level = 10 : i32, message = "bqd,bkd->bqk"}> : () -> ()
    %cst_34 = arith.constant dense<0.000000e+00> : vector<2x8x8xf32>
    %80 = tpu.matmul %70, %76, %cst_34 {dimension_numbers = #tpu.dot_dimension_numbers<[2], [2], [1], [1], [0, 0, 0, 1, 1, 1], [0], [0]>} : vector<2x8x32xbf16>, vector<2x8x32xbf16>, vector<2x8x8xf32> -> vector<2x8x8xf32>
    "tpu.trace_stop"() : () -> ()
    %cst_35 = arith.constant dense<0xFF800000> : vector<2x8xf32>
    %81 = vector.multi_reduction <maximumf>, %80, %cst_35 [2] : vector<2x8x8xf32> to vector<2x8xf32>
    %82 = vector.shape_cast %81 : vector<2x8xf32> to vector<2x8x1xf32>
    %83 = vector.broadcast %82 : vector<2x8x1xf32> to vector<2x8x8xf32>
    %84 = arith.subf %80, %83 : vector<2x8x8xf32>
    %85 = math.exp %84 : vector<2x8x8xf32>
    %cst_36 = arith.constant dense<0.000000e+00> : vector<2x8xf32>
    %86 = vector.multi_reduction <add>, %85, %cst_36 [2] : vector<2x8x8xf32> to vector<2x8xf32>
    %87 = vector.shape_cast %86 : vector<2x8xf32> to vector<2x8x1xf32>
    %88 = tpu.reciprocal %87 {approx = true} : vector<2x8x1xf32> -> vector<2x8x1xf32>
    %89 = vector.broadcast %88 : vector<2x8x1xf32> to vector<2x8x8xf32>
    %90 = arith.mulf %85, %89 : vector<2x8x8xf32>
    %91 = arith.truncf %90 : vector<2x8x8xf32> to vector<2x8x8xbf16>
    "tpu.trace_start"() <{level = 10 : i32, message = "bqk,bkd->bqd"}> : () -> ()
    %cst_37 = arith.constant dense<0.000000e+00> : vector<2x8x32xf32>
    %92 = tpu.matmul %91, %79, %cst_37 {dimension_numbers = #tpu.dot_dimension_numbers<[2], [1], [1], [2], [0, 0, 0, 1, 1, 2], [0], [0]>} : vector<2x8x8xbf16>, vector<2x8x32xbf16>, vector<2x8x32xf32> -> vector<2x8x32xf32>
    "tpu.trace_stop"() : () -> ()
    %93 = vector.shape_cast %92 : vector<2x8x32xf32> to vector<16x32xf32>
    %94 = arith.truncf %93 : vector<16x32xf32> to vector<16x32xbf16>
    %c0_38 = arith.constant 0 : index
    %c2 = arith.constant 2 : index
    %c0_39 = arith.constant 0 : index
    %c0_40 = arith.constant 0 : index
    %95 = vector.load %arg5[%c0_38, %c2, %c0_39, %c0_40] : memref<1x3x32x32xbf16, #tpu.memory_space<vmem>>, vector<1x1x32x32xbf16>
    %96 = vector.shape_cast %95 : vector<1x1x32x32xbf16> to vector<32x32xbf16>
    %cst_41 = arith.constant dense<0.000000e+00> : vector<16x32xf32>
    %97 = tpu.matmul %94, %96, %cst_41 {dimension_numbers = #tpu.dot_dimension_numbers<[1], [0], [0], [1], [0, 0, 1, 1], [], []>} : vector<16x32xbf16>, vector<32x32xbf16>, vector<16x32xf32> -> vector<16x32xf32>
    %98 = arith.addf %64, %97 : vector<16x32xf32>
    %99 = vector.extract_strided_slice %8 {offsets = [2, 0], sizes = [1, 32], strides = [1, 1]} : vector<6x32xf32> to vector<1x32xf32>
    %100 = vector.extract_strided_slice %8 {offsets = [3, 0], sizes = [1, 32], strides = [1, 1]} : vector<6x32xf32> to vector<1x32xf32>
    %cst_42 = arith.constant dense<0.000000e+00> : vector<16xf32>
    %101 = vector.multi_reduction <add>, %98, %cst_42 [1] : vector<16x32xf32> to vector<16xf32>
    %102 = vector.shape_cast %101 : vector<16xf32> to vector<16x1xf32>
    %cst_43 = arith.constant 3.200000e+01 : f32
    %103 = vector.broadcast %cst_43 : f32 to vector<16x1xf32>
    %104 = arith.divf %102, %103 : vector<16x1xf32>
    %105 = vector.broadcast %104 : vector<16x1xf32> to vector<16x32xf32>
    %106 = arith.subf %98, %105 : vector<16x32xf32>
    %107 = arith.mulf %106, %106 : vector<16x32xf32>
    %cst_44 = arith.constant dense<0.000000e+00> : vector<16xf32>
    %108 = vector.multi_reduction <add>, %107, %cst_44 [1] : vector<16x32xf32> to vector<16xf32>
    %109 = vector.shape_cast %108 : vector<16xf32> to vector<16x1xf32>
    %cst_45 = arith.constant 3.200000e+01 : f32
    %110 = vector.broadcast %cst_45 : f32 to vector<16x1xf32>
    %111 = arith.divf %109, %110 : vector<16x1xf32>
    %112 = vector.broadcast %104 : vector<16x1xf32> to vector<16x32xf32>
    %113 = arith.subf %98, %112 : vector<16x32xf32>
    %cst_46 = arith.constant 9.99999974E-6 : f32
    %114 = vector.broadcast %cst_46 : f32 to vector<16x1xf32>
    %115 = arith.addf %111, %114 : vector<16x1xf32>
    %116 = math.rsqrt %115 : vector<16x1xf32>
    %117 = vector.broadcast %116 : vector<16x1xf32> to vector<16x32xf32>
    %118 = arith.mulf %113, %117 : vector<16x32xf32>
    %119 = vector.broadcast %99 : vector<1x32xf32> to vector<16x32xf32>
    %120 = arith.mulf %118, %119 : vector<16x32xf32>
    %121 = vector.broadcast %100 : vector<1x32xf32> to vector<16x32xf32>
    %122 = arith.addf %120, %121 : vector<16x32xf32>
    %123 = arith.truncf %122 : vector<16x32xf32> to vector<16x32xbf16>
    %c0_47 = arith.constant 0 : index
    %c0_48 = arith.constant 0 : index
    %c0_49 = arith.constant 0 : index
    %124 = vector.load %arg7[%c0_47, %c0_48, %c0_49] : memref<1x32x64xbf16, #tpu.memory_space<vmem>>, vector<1x32x64xbf16>
    %125 = vector.shape_cast %124 : vector<1x32x64xbf16> to vector<32x64xbf16>
    %cst_50 = arith.constant dense<0.000000e+00> : vector<16x64xf32>
    %126 = tpu.matmul %123, %125, %cst_50 {dimension_numbers = #tpu.dot_dimension_numbers<[1], [0], [0], [1], [0, 0, 1, 1], [], []>} : vector<16x32xbf16>, vector<32x64xbf16>, vector<16x64xf32> -> vector<16x64xf32>
    %c0_51 = arith.constant 0 : index
    %c0_52 = arith.constant 0 : index
    %c0_53 = arith.constant 0 : index
    %127 = vector.load %arg8[%c0_51, %c0_52, %c0_53] : memref<1x1x64xf32, #tpu.memory_space<vmem>>, vector<1x1x64xf32>
    %128 = vector.shape_cast %127 : vector<1x1x64xf32> to vector<1x64xf32>
    %129 = vector.broadcast %128 : vector<1x64xf32> to vector<16x64xf32>
    %130 = arith.addf %126, %129 : vector<16x64xf32>
    %cst_54 = arith.constant 0.000000e+00 : f32
    %131 = vector.broadcast %cst_54 : f32 to vector<16x64xf32>
    %132 = arith.maximumf %130, %131 : vector<16x64xf32>
    %133 = arith.truncf %132 : vector<16x64xf32> to vector<16x64xbf16>
    %c0_55 = arith.constant 0 : index
    %c0_56 = arith.constant 0 : index
    %c0_57 = arith.constant 0 : index
    %134 = vector.load %arg9[%c0_55, %c0_56, %c0_57] : memref<1x64x32xbf16, #tpu.memory_space<vmem>>, vector<1x64x32xbf16>
    %135 = vector.shape_cast %134 : vector<1x64x32xbf16> to vector<64x32xbf16>
    %cst_58 = arith.constant dense<0.000000e+00> : vector<16x32xf32>
    %136 = tpu.matmul %133, %135, %cst_58 {dimension_numbers = #tpu.dot_dimension_numbers<[1], [0], [0], [1], [0, 0, 1, 1], [], []>} : vector<16x64xbf16>, vector<64x32xbf16>, vector<16x32xf32> -> vector<16x32xf32>
    %137 = arith.addf %122, %136 : vector<16x32xf32>
    %c0_59 = arith.constant 0 : index
    %c0_60 = arith.constant 0 : index
    %c0_61 = arith.constant 0 : index
    %138 = vector.load %arg10[%c0_59, %c0_60, %c0_61] : memref<1x1x32xf32, #tpu.memory_space<vmem>>, vector<1x1x32xf32>
    %139 = vector.shape_cast %138 : vector<1x1x32xf32> to vector<1x32xf32>
    %140 = vector.broadcast %139 : vector<1x32xf32> to vector<16x32xf32>
    %141 = arith.addf %137, %140 : vector<16x32xf32>
    %142 = vector.extract_strided_slice %8 {offsets = [4, 0], sizes = [1, 32], strides = [1, 1]} : vector<6x32xf32> to vector<1x32xf32>
    %143 = vector.extract_strided_slice %8 {offsets = [5, 0], sizes = [1, 32], strides = [1, 1]} : vector<6x32xf32> to vector<1x32xf32>
    %cst_62 = arith.constant dense<0.000000e+00> : vector<16xf32>
    %144 = vector.multi_reduction <add>, %141, %cst_62 [1] : vector<16x32xf32> to vector<16xf32>
    %145 = vector.shape_cast %144 : vector<16xf32> to vector<16x1xf32>
    %cst_63 = arith.constant 3.200000e+01 : f32
    %146 = vector.broadcast %cst_63 : f32 to vector<16x1xf32>
    %147 = arith.divf %145, %146 : vector<16x1xf32>
    %148 = vector.broadcast %147 : vector<16x1xf32> to vector<16x32xf32>
    %149 = arith.subf %141, %148 : vector<16x32xf32>
    %150 = arith.mulf %149, %149 : vector<16x32xf32>
    %cst_64 = arith.constant dense<0.000000e+00> : vector<16xf32>
    %151 = vector.multi_reduction <add>, %150, %cst_64 [1] : vector<16x32xf32> to vector<16xf32>
    %152 = vector.shape_cast %151 : vector<16xf32> to vector<16x1xf32>
    %cst_65 = arith.constant 3.200000e+01 : f32
    %153 = vector.broadcast %cst_65 : f32 to vector<16x1xf32>
    %154 = arith.divf %152, %153 : vector<16x1xf32>
    %155 = vector.broadcast %147 : vector<16x1xf32> to vector<16x32xf32>
    %156 = arith.subf %141, %155 : vector<16x32xf32>
    %cst_66 = arith.constant 9.99999974E-6 : f32
    %157 = vector.broadcast %cst_66 : f32 to vector<16x1xf32>
    %158 = arith.addf %154, %157 : vector<16x1xf32>
    %159 = math.rsqrt %158 : vector<16x1xf32>
    %160 = vector.broadcast %159 : vector<16x1xf32> to vector<16x32xf32>
    %161 = arith.mulf %156, %160 : vector<16x32xf32>
    %162 = vector.broadcast %142 : vector<1x32xf32> to vector<16x32xf32>
    %163 = arith.mulf %161, %162 : vector<16x32xf32>
    %164 = vector.broadcast %143 : vector<1x32xf32> to vector<16x32xf32>
    %165 = arith.addf %163, %164 : vector<16x32xf32>
    %166 = vector.shape_cast %165 : vector<16x32xf32> to vector<2x8x32xf32>
    %c0_67 = arith.constant 0 : index
    %c0_68 = arith.constant 0 : index
    %c0_69 = arith.constant 0 : index
    %167 = vector.load %arg18[%c0_67, %c0_68, %c0_69] : memref<2x8x32xf32, #tpu.memory_space<vmem>>, vector<2x8x32xf32>
    tpu.vector_store %arg18[%c0_67, %c0_68, %c0_69], %166 {strides = array<i32>} : memref<2x8x32xf32, #tpu.memory_space<vmem>>, vector<2x8x32xf32>,
    %168 = tpu.iota {dimensions = array<i32: 0>} : vector<8x128xi32>
    %c128_i32 = arith.constant 128 : i32
    %169 = vector.broadcast %c128_i32 : i32 to vector<8x128xi32>
    %170 = arith.muli %168, %169 : vector<8x128xi32>
    %171 = tpu.iota {dimensions = array<i32: 1>} : vector<8x128xi32>
    %172 = arith.addi %170, %171 : vector<8x128xi32>
    %c0_70 = arith.constant 0 : index
    %c0_71 = arith.constant 0 : index
    %c0_72 = arith.constant 0 : index
    %173 = vector.load %arg16[%c0_70, %c0_71, %c0_72] : memref<1x8x128xf32, #tpu.memory_space<vmem>>, vector<1x8x128xf32>
    %174 = vector.shape_cast %173 : vector<1x8x128xf32> to vector<8x128xf32>
    %175 = vector.broadcast %arg1 : i32 to vector<8x128xi32>
    %176 = arith.cmpi eq, %172, %175 : vector<8x128xi32>
    %177 = arith.mulf %32, %32 : vector<2x8x8xf32>
    %178 = vector.shape_cast %177 : vector<2x8x8xf32> to vector<1x2x8x8xf32>
    %cst_73 = arith.constant dense<0.000000e+00> : vector<1xf32>
    %179 = vector.multi_reduction <add>, %178, %cst_73 [1, 2, 3] : vector<1x2x8x8xf32> to vector<1xf32>
    %180 = vector.shape_cast %179 : vector<1xf32> to vector<1x1x1x1xf32>
    %181 = vector.extract %180[0, 0, 0, 0] : f32 from vector<1x1x1x1xf32>
    %cst_74 = arith.constant 7.812500e-03 : f32
    %182 = arith.mulf %181, %cst_74 : f32
    %cst_75 = arith.constant 0.000000e+00 : f32
    %183 = vector.broadcast %182 : f32 to vector<8x128xf32>
    %184 = vector.broadcast %cst_75 : f32 to vector<8x128xf32>
    %185 = arith.select %176, %183, %184 : vector<8x128xi1>, vector<8x128xf32>
    %186 = arith.addf %174, %185 : vector<8x128xf32>
    %c0_76 = arith.constant 0 : index
    %c0_77 = arith.constant 0 : index
    %c0_78 = arith.constant 0 : index
    %187 = vector.load %arg16[%c0_76, %c0_77, %c0_78] : memref<1x8x128xf32, #tpu.memory_space<vmem>>, vector<1x8x128xf32>
    %188 = vector.shape_cast %187 : vector<1x8x128xf32> to vector<8x128xf32>
    %189 = vector.shape_cast %186 : vector<8x128xf32> to vector<1x8x128xf32>
    tpu.vector_store %arg16[%c0_76, %c0_77, %c0_78], %189 {strides = array<i32>} : memref<1x8x128xf32, #tpu.memory_space<vmem>>, vector<1x8x128xf32>,
    %c0_79 = arith.constant 0 : index
    %c0_80 = arith.constant 0 : index
    %c0_81 = arith.constant 0 : index
    %190 = vector.load %arg17[%c0_79, %c0_80, %c0_81] : memref<1x8x128xf32, #tpu.memory_space<vmem>>, vector<1x8x128xf32>
    %191 = vector.shape_cast %190 : vector<1x8x128xf32> to vector<8x128xf32>
    %192 = vector.broadcast %arg1 : i32 to vector<8x128xi32>
    %193 = arith.cmpi eq, %172, %192 : vector<8x128xi32>
    %194 = arith.mulf %90, %90 : vector<2x8x8xf32>
    %195 = vector.shape_cast %194 : vector<2x8x8xf32> to vector<1x2x8x8xf32>
    %cst_82 = arith.constant dense<0.000000e+00> : vector<1xf32>
    %196 = vector.multi_reduction <add>, %195, %cst_82 [1, 2, 3] : vector<1x2x8x8xf32> to vector<1xf32>
    %197 = vector.shape_cast %196 : vector<1xf32> to vector<1x1x1x1xf32>
    %198 = vector.extract %197[0, 0, 0, 0] : f32 from vector<1x1x1x1xf32>
    %cst_83 = arith.constant 7.812500e-03 : f32
    %199 = arith.mulf %198, %cst_83 : f32
    %cst_84 = arith.constant 0.000000e+00 : f32
    %200 = vector.broadcast %199 : f32 to vector<8x128xf32>
    %201 = vector.broadcast %cst_84 : f32 to vector<8x128xf32>
    %202 = arith.select %193, %200, %201 : vector<8x128xi1>, vector<8x128xf32>
    %203 = arith.addf %191, %202 : vector<8x128xf32>
    %c0_85 = arith.constant 0 : index
    %c0_86 = arith.constant 0 : index
    %c0_87 = arith.constant 0 : index
    %204 = vector.load %arg17[%c0_85, %c0_86, %c0_87] : memref<1x8x128xf32, #tpu.memory_space<vmem>>, vector<1x8x128xf32>
    %205 = vector.shape_cast %204 : vector<1x8x128xf32> to vector<8x128xf32>
    %206 = vector.shape_cast %203 : vector<8x128xf32> to vector<1x8x128xf32>
    tpu.vector_store %arg17[%c0_85, %c0_86, %c0_87], %206 {strides = array<i32>} : memref<1x8x128xf32, #tpu.memory_space<vmem>>, vector<1x8x128xf32>,
    %c1_i32 = arith.constant 1 : i32
    %207 = arith.cmpi eq, %arg1, %c1_i32 : i32
    %208 = arith.extui %207 : i1 to i32
    %c0_i32_88 = arith.constant 0 : i32
    %209 = arith.cmpi ne, %208, %c0_i32_88 : i32
    scf.if %209 {
      %c0_89 = arith.constant 0 : index
      %c0_90 = arith.constant 0 : index
      %210 = vector.load %arg12[%c0_89, %c0_90] : memref<2x32xf32, #tpu.memory_space<vmem>>, vector<2x32xf32>
      %211 = vector.extract_strided_slice %210 {offsets = [0, 0], sizes = [1, 32], strides = [1, 1]} : vector<2x32xf32> to vector<1x32xf32>
      %212 = vector.extract_strided_slice %210 {offsets = [1, 0], sizes = [1, 32], strides = [1, 1]} : vector<2x32xf32> to vector<1x32xf32>
      %cst_91 = arith.constant dense<0.000000e+00> : vector<16xf32>
      %213 = vector.multi_reduction <add>, %165, %cst_91 [1] : vector<16x32xf32> to vector<16xf32>
      %214 = vector.shape_cast %213 : vector<16xf32> to vector<16x1xf32>
      %cst_92 = arith.constant 3.200000e+01 : f32
      %215 = vector.broadcast %cst_92 : f32 to vector<16x1xf32>
      %216 = arith.divf %214, %215 : vector<16x1xf32>
      %217 = vector.broadcast %216 : vector<16x1xf32> to vector<16x32xf32>
      %218 = arith.subf %165, %217 : vector<16x32xf32>
      %219 = arith.mulf %218, %218 : vector<16x32xf32>
      %cst_93 = arith.constant dense<0.000000e+00> : vector<16xf32>
      %220 = vector.multi_reduction <add>, %219, %cst_93 [1] : vector<16x32xf32> to vector<16xf32>
      %221 = vector.shape_cast %220 : vector<16xf32> to vector<16x1xf32>
      %cst_94 = arith.constant 3.200000e+01 : f32
      %222 = vector.broadcast %cst_94 : f32 to vector<16x1xf32>
      %223 = arith.divf %221, %222 : vector<16x1xf32>
      %224 = vector.broadcast %216 : vector<16x1xf32> to vector<16x32xf32>
      %225 = arith.subf %165, %224 : vector<16x32xf32>
      %cst_95 = arith.constant 9.99999974E-6 : f32
      %226 = vector.broadcast %cst_95 : f32 to vector<16x1xf32>
      %227 = arith.addf %223, %226 : vector<16x1xf32>
      %228 = math.rsqrt %227 : vector<16x1xf32>
      %229 = vector.broadcast %228 : vector<16x1xf32> to vector<16x32xf32>
      %230 = arith.mulf %225, %229 : vector<16x32xf32>
      %231 = vector.broadcast %211 : vector<1x32xf32> to vector<16x32xf32>
      %232 = arith.mulf %230, %231 : vector<16x32xf32>
      %233 = vector.broadcast %212 : vector<1x32xf32> to vector<16x32xf32>
      %234 = arith.addf %232, %233 : vector<16x32xf32>
      %235 = arith.truncf %234 : vector<16x32xf32> to vector<16x32xbf16>
      %c0_96 = arith.constant 0 : index
      %c0_97 = arith.constant 0 : index
      %236 = vector.load %arg13[%c0_96, %c0_97] : memref<32x128xbf16, #tpu.memory_space<vmem>>, vector<32x128xbf16>
      %cst_98 = arith.constant dense<0.000000e+00> : vector<16x128xf32>
      %237 = tpu.matmul %235, %236, %cst_98 {dimension_numbers = #tpu.dot_dimension_numbers<[1], [0], [0], [1], [0, 0, 1, 1], [], []>} : vector<16x32xbf16>, vector<32x128xbf16>, vector<16x128xf32> -> vector<16x128xf32>
      %c0_99 = arith.constant 0 : index
      %c0_100 = arith.constant 0 : index
      %238 = vector.load %arg14[%c0_99, %c0_100] : memref<1x128xf32, #tpu.memory_space<vmem>>, vector<1x128xf32>
      %239 = vector.broadcast %238 : vector<1x128xf32> to vector<16x128xf32>
      %240 = arith.addf %237, %239 : vector<16x128xf32>
      %241 = vector.shape_cast %240 : vector<16x128xf32> to vector<2x8x128xf32>
      %242 = arith.truncf %241 : vector<2x8x128xf32> to vector<2x8x128xbf16>
      %c0_101 = arith.constant 0 : index
      %c0_102 = arith.constant 0 : index
      %c0_103 = arith.constant 0 : index
      %243 = vector.load %arg15[%c0_101, %c0_102, %c0_103] : memref<2x8x128xbf16, #tpu.memory_space<vmem>>, vector<2x8x128xbf16>
      tpu.vector_store %arg15[%c0_101, %c0_102, %c0_103], %242 {strides = array<i32>} : memref<2x8x128xbf16, #tpu.memory_space<vmem>>, vector<2x8x128xbf16>,
    } else {
    }
    return
  }
  func.func @transform_0(%arg0: i32, %arg1: i32) -> (i32, i32, i32) {
    %c0_i32 = arith.constant 0 : i32
    %c0_i32_0 = arith.constant 0 : i32
    %c0_i32_1 = arith.constant 0 : i32
    return %arg0, %c0_i32, %c0_i32_0 : i32, i32, i32
  }
  func.func @transform_1(%arg0: i32, %arg1: i32) -> (i32, i32, i32) {
    %c0_i32 = arith.constant 0 : i32
    %c0_i32_0 = arith.constant 0 : i32
    %c0_i32_1 = arith.constant 0 : i32
    return %arg0, %c0_i32, %c0_i32_0 : i32, i32, i32
  }
  func.func @transform_2(%arg0: i32, %arg1: i32) -> (i32, i32, i32) {
    %c0_i32 = arith.constant 0 : i32
    %c0_i32_0 = arith.constant 0 : i32
    %c0_i32_1 = arith.constant 0 : i32
    return %arg1, %c0_i32, %c0_i32_0 : i32, i32, i32
  }
  func.func @transform_3(%arg0: i32, %arg1: i32) -> (i32, i32, i32, i32) {
    %c0_i32 = arith.constant 0 : i32
    %c0_i32_0 = arith.constant 0 : i32
    %c0_i32_1 = arith.constant 0 : i32
    %c0_i32_2 = arith.constant 0 : i32
    return %arg1, %c0_i32, %c0_i32_0, %c0_i32_1 : i32, i32, i32, i32
  }
  func.func @transform_4(%arg0: i32, %arg1: i32) -> (i32, i32, i32) {
    %c0_i32 = arith.constant 0 : i32
    %c0_i32_0 = arith.constant 0 : i32
    %c0_i32_1 = arith.constant 0 : i32
    return %arg1, %c0_i32, %c0_i32_0 : i32, i32, i32
  }
  func.func @transform_5(%arg0: i32, %arg1: i32) -> (i32, i32, i32) {
    %c0_i32 = arith.constant 0 : i32
    %c0_i32_0 = arith.constant 0 : i32
    %c0_i32_1 = arith.constant 0 : i32
    return %arg1, %c0_i32, %c0_i32_0 : i32, i32, i32
  }
  func.func @transform_6(%arg0: i32, %arg1: i32) -> (i32, i32, i32) {
    %c0_i32 = arith.constant 0 : i32
    %c0_i32_0 = arith.constant 0 : i32
    %c0_i32_1 = arith.constant 0 : i32
    return %arg1, %c0_i32, %c0_i32_0 : i32, i32, i32
  }
  func.func @transform_7(%arg0: i32, %arg1: i32) -> (i32, i32, i32) {
    %c0_i32 = arith.constant 0 : i32
    %c0_i32_0 = arith.constant 0 : i32
    %c0_i32_1 = arith.constant 0 : i32
    return %arg1, %c0_i32, %c0_i32_0 : i32, i32, i32
  }
  func.func @transform_8(%arg0: i32, %arg1: i32) -> (i32, i32, i32) {
    %c0_i32 = arith.constant 0 : i32
    %c0_i32_0 = arith.constant 0 : i32
    %c0_i32_1 = arith.constant 0 : i32
    return %arg1, %c0_i32, %c0_i32_0 : i32, i32, i32
  }
  func.func @transform_9(%arg0: i32, %arg1: i32) -> (i32, i32, i32) {
    %c0_i32 = arith.constant 0 : i32
    %c0_i32_0 = arith.constant 0 : i32
    %c0_i32_1 = arith.constant 0 : i32
    return %arg1, %c0_i32, %c0_i32_0 : i32, i32, i32
  }
  func.func @transform_10(%arg0: i32, %arg1: i32) -> (i32, i32) {
    %c0_i32 = arith.constant 0 : i32
    %c0_i32_0 = arith.constant 0 : i32
    %c0_i32_1 = arith.constant 0 : i32
    return %c0_i32, %c0_i32_0 : i32, i32
  }
  func.func @transform_11(%arg0: i32, %arg1: i32) -> (i32, i32) {
    %c0_i32 = arith.constant 0 : i32
    %c0_i32_0 = arith.constant 0 : i32
    %c0_i32_1 = arith.constant 0 : i32
    return %c0_i32, %c0_i32_0 : i32, i32
  }
  func.func @transform_12(%arg0: i32, %arg1: i32) -> (i32, i32) {
    %c0_i32 = arith.constant 0 : i32
    %c0_i32_0 = arith.constant 0 : i32
    %c0_i32_1 = arith.constant 0 : i32
    return %c0_i32, %c0_i32_0 : i32, i32
  }
  func.func @transform_13(%arg0: i32, %arg1: i32) -> (i32, i32, i32) {
    %c0_i32 = arith.constant 0 : i32
    %c0_i32_0 = arith.constant 0 : i32
    %c0_i32_1 = arith.constant 0 : i32
    return %arg0, %c0_i32, %c0_i32_0 : i32, i32, i32
  }
  func.func @transform_14(%arg0: i32, %arg1: i32) -> (i32, i32, i32) {
    %c0_i32 = arith.constant 0 : i32
    %c0_i32_0 = arith.constant 0 : i32
    %c0_i32_1 = arith.constant 0 : i32
    return %arg0, %c0_i32, %c0_i32_0 : i32, i32, i32
  }
  func.func @transform_15(%arg0: i32, %arg1: i32) -> (i32, i32, i32) {
    %c0_i32 = arith.constant 0 : i32
    %c0_i32_0 = arith.constant 0 : i32
    %c0_i32_1 = arith.constant 0 : i32
    return %arg0, %c0_i32, %c0_i32_0 : i32, i32, i32
  }
}

</mosaic_0001>

<llo_original>
// kernel: decoder_forward.1
$region0: #{decoder_forward.1}
  #allocation0 [shape = 'u32[]', space=smem, size = 0x4, offset = 0x4, fixed_abs, tag = 'smem constant byte address 0x4 - core index']
  #allocation1 [shape = 'u32[144,128]{1,0:T(1,128)}', space=vmem, size = 0x12000, scoped, tag = 'internal scratch']
  #allocation2 [shape = 'f32[2,8,32]{2,1,0:T(8,128)}', space=vmem, size = 0x2000, scoped, tag = 'scratch operand']
  %s0 = inlined_call_operand.hbm [shape: f32[2,8,32], index: 0, kind: input, shape index: {}]
  %s1 = inlined_call_operand.hbm [shape: bf16[2,8,32], index: 1, kind: input, shape index: {}]
  %s2 = inlined_call_operand.hbm [shape: bf16[2,32,96], index: 2, kind: input, shape index: {}]
  %s3 = inlined_call_operand.hbm [shape: bf16[2,3,32,32], index: 3, kind: input, shape index: {}]
  %s4 = inlined_call_operand.hbm [shape: bf16[2,32,64], index: 4, kind: input, shape index: {}]
  %s5 = inlined_call_operand.hbm [shape: bf16[2,32,64], index: 5, kind: input, shape index: {}]
  %s6 = inlined_call_operand.hbm [shape: f32[2,1,64], index: 6, kind: input, shape index: {}]
  %s7 = inlined_call_operand.hbm [shape: bf16[2,64,32], index: 7, kind: input, shape index: {}]
  %s8 = inlined_call_operand.hbm [shape: f32[2,1,32], index: 8, kind: input, shape index: {}]
  %s9 = inlined_call_operand.hbm [shape: f32[2,6,32], index: 9, kind: input, shape index: {}]
  %s10 = inlined_call_operand.hbm [shape: f32[2,32], index: 10, kind: input, shape index: {}]
  %s11 = inlined_call_operand.hbm [shape: bf16[32,128], index: 11, kind: input, shape index: {}]
  %s12 = inlined_call_operand.hbm [shape: f32[1,128], index: 12, kind: input, shape index: {}]
  %s13 = inlined_call_operand.hbm [shape: bf16[2,8,128], index: 13, kind: output, shape index: {0}]
  %s14 = inlined_call_operand.hbm [shape: f32[1,8,128], index: 14, kind: output, shape index: {1}]
  %s15 = inlined_call_operand.hbm [shape: f32[1,8,128], index: 15, kind: output, shape index: {2}]
  %16 = xla_tuple %s13, %s14, %s15
  %s17 = sld [smem:[#allocation0]]
  $region161: #{decoder_forward.1} parent=0
    _
  %s19 = ssub.s32 1, %s17
  %s20 = scalar_select 0, %s19, %s17
  $region1: #{decoder_forward.1} parent=0
    #allocation3 [shape = 'u8[8192]{0}', space=vmem, size = 0x2000, scoped, tag = 'input window, operand 0, single buffered']
    #allocation4 [shape = 's32[2]{0}', space=sflag, size = 0x8, scoped, tag = 'scoped memory for decoder_forward.1']
    #allocation5 [shape = 's32[2]{0}', space=sflag, size = 0x8, scoped, tag = 'scoped memory for decoder_forward.1']
    #allocation6 [shape = 'u8[4096]{0}', space=vmem, size = 0x1000, scoped, tag = 'input window, operand 1, single buffered']
    #allocation7 [shape = 's32[1]{0}', space=sflag, size = 0x4, scoped, tag = 'scoped memory for decoder_forward.1']
    #allocation8 [shape = 'u8[16384]{0}', space=vmem, size = 0x4000, scoped, tag = 'input window, operand 2']
    #allocation9 [shape = 'u8[49152]{0}', space=vmem, size = 0xc000, scoped, tag = 'input window, operand 3']
    #allocation10 [shape = 'u8[16384]{0}', space=vmem, size = 0x4000, scoped, tag = 'input window, operand 4']
    #allocation11 [shape = 'u8[16384]{0}', space=vmem, size = 0x4000, scoped, tag = 'input window, operand 5']
    #allocation12 [shape = 'u8[1024]{0}', space=vmem, size = 0x400, scoped, tag = 'input window, operand 6']
    #allocation13 [shape = 'u8[32768]{0}', space=vmem, size = 0x8000, scoped, tag = 'input window, operand 7']
    #allocation14 [shape = 'u8[1024]{0}', space=vmem, size = 0x400, scoped, tag = 'input window, operand 8']
    #allocation15 [shape = 'u8[8192]{0}', space=vmem, size = 0x2000, scoped, tag = 'input window, operand 9']
    #allocation16 [shape = 'u8[1024]{0}', space=vmem, size = 0x400, scoped, tag = 'input window, operand 10, single buffered']
    #allocation17 [shape = 'u8[8192]{0}', space=vmem, size = 0x2000, scoped, tag = 'input window, operand 11, single buffered']
    #allocation18 [shape = 's32[1]{0}', space=sflag, size = 0x4, scoped, tag = 'scoped memory for decoder_forward.1']
    #allocation19 [shape = 'u8[512]{0}', space=vmem, size = 0x400, scoped, tag = 'input window, operand 12, single buffered']
    #allocation20 [shape = 'u8[4096]{0}', space=vmem, size = 0x1000, scoped, tag = 'output window, operand 0, single buffered']
    #allocation21 [shape = 'u8[4096]{0}', space=vmem, size = 0x1000, scoped, tag = 'output window, operand 1, single buffered']
    #allocation22 [shape = 's32[1]{0}', space=sflag, size = 0x4, scoped, tag = 'scoped memory for decoder_forward.1']
    #allocation23 [shape = 'u8[4096]{0}', space=vmem, size = 0x1000, scoped, tag = 'output window, operand 2, single buffered']
    %21 = vsyncpa [#allocation4], 0
    %22 = vsyncpa [#allocation7], 0
    %23 = vsyncpa [#allocation18], 0
    %24 = vsyncpa [#allocation5], 0
    %25 = vsyncpa [#allocation22], 0
    loop: start=0, step=1, limit=4
    $region2: #{decoder_forward.1} parent=1 // loop_pre_header
      _
    $region3: #{decoder_forward.1} parent=1 // loop_header
      %s27 = sphi 0, %s31
      %p28 = scmp.ge.s32.totalorder %s27, 4
      %s34 = sphi 0, %s46
      %s35 = sphi 0, %s42
      %s36 = sphi 0, %s34
      %s37 = sphi 0, %s35
      %s38 = sphi 0, %s36
      %s39 = sphi 0, %s37
      %s49 = sphi 0, %s51
      %s52 = sphi 0, %s49
      %s53 = sphi 0, %s52
      %s69 = sphi 0, %s53
      %s75 = sphi 0, %s77
      %s78 = sphi 0, %s75
      %s79 = sphi 0, %s78
      %s95 = sphi 0, %s79
      %s101 = sphi 0, %s103
      %s104 = sphi 0, %s101
      %s105 = sphi 0, %s104
      %s121 = sphi 0, %s105
      %s127 = sphi 0, %s129
      %s130 = sphi 0, %s127
      %s131 = sphi 0, %s130
      %s147 = sphi 0, %s131
      %s153 = sphi 0, %s155
      %s156 = sphi 0, %s153
      %s157 = sphi 0, %s156
      %s173 = sphi 0, %s157
      %s179 = sphi 0, %s181
      %s182 = sphi 0, %s179
      %s183 = sphi 0, %s182
      %s199 = sphi 0, %s183
      %s205 = sphi 0, %s207
      %s208 = sphi 0, %s205
      %s209 = sphi 0, %s208
      %s225 = sphi 0, %s209
      %s231 = sphi 0, %s233
      %s234 = sphi 0, %s231
      %s235 = sphi 0, %s234
      %s251 = sphi 0, %s235
      %s257 = sphi 0, %s259
      %s260 = sphi 0, %s257
      %s261 = sphi 0, %s260
      %s277 = sphi 0, %s261
      %s283 = sphi 0, %s285
      %s286 = sphi 0, %s283
      %s287 = sphi 0, %s286
      %s303 = sphi 0, %s287
      %s307 = sphi 0, %s307
      %s309 = sphi 0, %s307
      %s310 = sphi 0, %s309
      %s324 = sphi 0, %s310
      %s328 = sphi 0, %s328
      %s330 = sphi 0, %s328
      %s331 = sphi 0, %s330
      %s345 = sphi 0, %s331
      %s349 = sphi 0, %s349
      %s351 = sphi 0, %s349
      %s352 = sphi 0, %s351
      %s366 = sphi 0, %s352
      %s372 = sphi 0, %s374
      %s375 = sphi 0, %s372
      %s376 = sphi 0, %s375
      %s392 = sphi 0, %s376
      %s398 = sphi 0, %s400
      %s401 = sphi 0, %s398
      %s402 = sphi 0, %s401
      %s418 = sphi 0, %s402
      %s424 = sphi 0, %s426
      %s427 = sphi 0, %s424
      %s428 = sphi 0, %s427
      %s444 = sphi 0, %s428
    $region4: #{decoder_forward.1} parent=1 // loop_header_branch
      %30 = sbr.rel (%p28) target = $region8
    $region5: #{decoder_forward.1} parent=1 // loop_body
      %s32 = ssub.s32 %s27, 1
      %s33 = ssub.s32 %s27, 2
      %s40 = sadd.s32 1, %s35
      %p41 = scmp.ge.s32.totalorder %s40, 2
      %s42 = scalar_select %p41, 0, %s40
      %s43 = sadd.s32 1, %s34
      %s44 = scalar_select %p41, %s43, %s34
      %p45 = scmp.ge.s32.totalorder %s44, 1
      %s46 = scalar_select %p45, 0, %s44
      %s47 = ssub.s32 %s34, %s46
      %p48 = scmp.eq.s32.totalorder %s47, 0
      %s50 = sadd.s32 %s49, 1
      %s51 = scalar_select %p48, %s49, %s50
      %p54 = pneg %p48
      %p55 = scmp.eq.s32.totalorder %s27, 1
      %p56 = por %p54, %p55
      %p57 = scmp.ne.s32.totalorder %s49, %s52
      %p58 = scmp.eq.s32.totalorder %s27, 0
      %p59 = por %p57, %p58
      %p60 = scmp.ne.s32.totalorder %s49, %s52
      %p61 = scmp.eq.s32.totalorder %s32, 1
      %p62 = por %p60, %p61
      %p63 = scmp.ne.s32.totalorder %s52, %s53
      %p64 = scmp.eq.s32.totalorder %s32, 0
      %p65 = por %p63, %p64
      %p66 = scmp.ne.s32.totalorder %s52, %s53
      %p67 = scmp.eq.s32.totalorder %s33, 1
      %p68 = por %p66, %p67
      %p70 = scmp.ne.s32.totalorder %s53, %s69
      %p71 = scmp.eq.s32.totalorder %s33, 0
      %p72 = por %p70, %p71
      %s73 = ssub.s32 %s34, %s46
      %p74 = scmp.eq.s32.totalorder %s73, 0
      %s76 = sadd.s32 %s75, 1
      %s77 = scalar_select %p74, %s75, %s76
      %p80 = pneg %p74
      %p81 = scmp.eq.s32.totalorder %s27, 1
      %p82 = por %p80, %p81
      %p83 = scmp.ne.s32.totalorder %s75, %s78
      %p84 = scmp.eq.s32.totalorder %s27, 0
      %p85 = por %p83, %p84
      %p86 = scmp.ne.s32.totalorder %s75, %s78
      %p87 = scmp.eq.s32.totalorder %s32, 1
      %p88 = por %p86, %p87
      %p89 = scmp.ne.s32.totalorder %s78, %s79
      %p90 = scmp.eq.s32.totalorder %s32, 0
      %p91 = por %p89, %p90
      %p92 = scmp.ne.s32.totalorder %s78, %s79
      %p93 = scmp.eq.s32.totalorder %s33, 1
      %p94 = por %p92, %p93
      %p96 = scmp.ne.s32.totalorder %s79, %s95
      %p97 = scmp.eq.s32.totalorder %s33, 0
      %p98 = por %p96, %p97
      %s99 = ssub.s32 %s35, %s42
      %p100 = scmp.eq.s32.totalorder %s99, 0
      %s102 = sadd.s32 %s101, 1
      %s103 = scalar_select %p100, %s101, %s102
      %p106 = pneg %p100
      %p107 = scmp.eq.s32.totalorder %s27, 1
      %p108 = por %p106, %p107
      %p109 = scmp.ne.s32.totalorder %s101, %s104
      %p110 = scmp.eq.s32.totalorder %s27, 0
      %p111 = por %p109, %p110
      %p112 = scmp.ne.s32.totalorder %s101, %s104
      %p113 = scmp.eq.s32.totalorder %s32, 1
      %p114 = por %p112, %p113
      %p115 = scmp.ne.s32.totalorder %s104, %s105
      %p116 = scmp.eq.s32.totalorder %s32, 0
      %p117 = por %p115, %p116
      %p118 = scmp.ne.s32.totalorder %s104, %s105
      %p119 = scmp.eq.s32.totalorder %s33, 1
      %p120 = por %p118, %p119
      %p122 = scmp.ne.s32.totalorder %s105, %s121
      %p123 = scmp.eq.s32.totalorder %s33, 0
      %p124 = por %p122, %p123
      %s125 = ssub.s32 %s35, %s42
      %p126 = scmp.eq.s32.totalorder %s125, 0
      %s128 = sadd.s32 %s127, 1
      %s129 = scalar_select %p126, %s127, %s128
      %p132 = pneg %p126
      %p133 = scmp.eq.s32.totalorder %s27, 1
      %p134 = por %p132, %p133
      %p135 = scmp.ne.s32.totalorder %s127, %s130
      %p136 = scmp.eq.s32.totalorder %s27, 0
      %p137 = por %p135, %p136
      %p138 = scmp.ne.s32.totalorder %s127, %s130
      %p139 = scmp.eq.s32.totalorder %s32, 1
      %p140 = por %p138, %p139
      %p141 = scmp.ne.s32.totalorder %s130, %s131
      %p142 = scmp.eq.s32.totalorder %s32, 0
      %p143 = por %p141, %p142
      %p144 = scmp.ne.s32.totalorder %s130, %s131
      %p145 = scmp.eq.s32.totalorder %s33, 1
      %p146 = por %p144, %p145
      %p148 = scmp.ne.s32.totalorder %s131, %s147
      %p149 = scmp.eq.s32.totalorder %s33, 0
      %p150 = por %p148, %p149
      %s151 = ssub.s32 %s35, %s42
      %p152 = scmp.eq.s32.totalorder %s151, 0
      %s154 = sadd.s32 %s153, 1
      %s155 = scalar_select %p152, %s153, %s154
      %p158 = pneg %p152
      %p159 = scmp.eq.s32.totalorder %s27, 1
      %p160 = por %p158, %p159
      %p161 = scmp.ne.s32.totalorder %s153, %s156
      %p162 = scmp.eq.s32.totalorder %s27, 0
      %p163 = por %p161, %p162
      %p164 = scmp.ne.s32.totalorder %s153, %s156
      %p165 = scmp.eq.s32.totalorder %s32, 1
      %p166 = por %p164, %p165
      %p167 = scmp.ne.s32.totalorder %s156, %s157
      %p168 = scmp.eq.s32.totalorder %s32, 0
      %p169 = por %p167, %p168
      %p170 = scmp.ne.s32.totalorder %s156, %s157
      %p171 = scmp.eq.s32.totalorder %s33, 1
      %p172 = por %p170, %p171
      %p174 = scmp.ne.s32.totalorder %s157, %s173
      %p175 = scmp.eq.s32.totalorder %s33, 0
      %p176 = por %p174, %p175
      %s177 = ssub.s32 %s35, %s42
      %p178 = scmp.eq.s32.totalorder %s177, 0
      %s180 = sadd.s32 %s179, 1
      %s181 = scalar_select %p178, %s179, %s180
      %p184 = pneg %p178
      %p185 = scmp.eq.s32.totalorder %s27, 1
      %p186 = por %p184, %p185
      %p187 = scmp.ne.s32.totalorder %s179, %s182
      %p188 = scmp.eq.s32.totalorder %s27, 0
      %p189 = por %p187, %p188
      %p190 = scmp.ne.s32.totalorder %s179, %s182
      %p191 = scmp.eq.s32.totalorder %s32, 1
      %p192 = por %p190, %p191
      %p193 = scmp.ne.s32.totalorder %s182, %s183
      %p194 = scmp.eq.s32.totalorder %s32, 0
      %p195 = por %p193, %p194
      %p196 = scmp.ne.s32.totalorder %s182, %s183
      %p197 = scmp.eq.s32.totalorder %s33, 1
      %p198 = por %p196, %p197
      %p200 = scmp.ne.s32.totalorder %s183, %s199
      %p201 = scmp.eq.s32.totalorder %s33, 0
      %p202 = por %p200, %p201
      %s203 = ssub.s32 %s35, %s42
      %p204 = scmp.eq.s32.totalorder %s203, 0
      %s206 = sadd.s32 %s205, 1
      %s207 = scalar_select %p204, %s205, %s206
      %p210 = pneg %p204
      %p211 = scmp.eq.s32.totalorder %s27, 1
      %p212 = por %p210, %p211
      %p213 = scmp.ne.s32.totalorder %s205, %s208
      %p214 = scmp.eq.s32.totalorder %s27, 0
      %p215 = por %p213, %p214
      %p216 = scmp.ne.s32.totalorder %s205, %s208
      %p217 = scmp.eq.s32.totalorder %s32, 1
      %p218 = por %p216, %p217
      %p219 = scmp.ne.s32.totalorder %s208, %s209
      %p220 = scmp.eq.s32.totalorder %s32, 0
      %p221 = por %p219, %p220
      %p222 = scmp.ne.s32.totalorder %s208, %s209
      %p223 = scmp.eq.s32.totalorder %s33, 1
      %p224 = por %p222, %p223
      %p226 = scmp.ne.s32.totalorder %s209, %s225
      %p227 = scmp.eq.s32.totalorder %s33, 0
      %p228 = por %p226, %p227
      %s229 = ssub.s32 %s35, %s42
      %p230 = scmp.eq.s32.totalorder %s229, 0
      %s232 = sadd.s32 %s231, 1
      %s233 = scalar_select %p230, %s231, %s232
      %p236 = pneg %p230
      %p237 = scmp.eq.s32.totalorder %s27, 1
      %p238 = por %p236, %p237
      %p239 = scmp.ne.s32.totalorder %s231, %s234
      %p240 = scmp.eq.s32.totalorder %s27, 0
      %p241 = por %p239, %p240
      %p242 = scmp.ne.s32.totalorder %s231, %s234
      %p243 = scmp.eq.s32.totalorder %s32, 1
      %p244 = por %p242, %p243
      %p245 = scmp.ne.s32.totalorder %s234, %s235
      %p246 = scmp.eq.s32.totalorder %s32, 0
      %p247 = por %p245, %p246
      %p248 = scmp.ne.s32.totalorder %s234, %s235
      %p249 = scmp.eq.s32.totalorder %s33, 1
      %p250 = por %p248, %p249
      %p252 = scmp.ne.s32.totalorder %s235, %s251
      %p253 = scmp.eq.s32.totalorder %s33, 0
      %p254 = por %p252, %p253
      %s255 = ssub.s32 %s35, %s42
      %p256 = scmp.eq.s32.totalorder %s255, 0
      %s258 = sadd.s32 %s257, 1
      %s259 = scalar_select %p256, %s257, %s258
      %p262 = pneg %p256
      %p263 = scmp.eq.s32.totalorder %s27, 1
      %p264 = por %p262, %p263
      %p265 = scmp.ne.s32.totalorder %s257, %s260
      %p266 = scmp.eq.s32.totalorder %s27, 0
      %p267 = por %p265, %p266
      %p268 = scmp.ne.s32.totalorder %s257, %s260
      %p269 = scmp.eq.s32.totalorder %s32, 1
      %p270 = por %p268, %p269
      %p271 = scmp.ne.s32.totalorder %s260, %s261
      %p272 = scmp.eq.s32.totalorder %s32, 0
      %p273 = por %p271, %p272
      %p274 = scmp.ne.s32.totalorder %s260, %s261
      %p275 = scmp.eq.s32.totalorder %s33, 1
      %p276 = por %p274, %p275
      %p278 = scmp.ne.s32.totalorder %s261, %s277
      %p279 = scmp.eq.s32.totalorder %s33, 0
      %p280 = por %p278, %p279
      %s281 = ssub.s32 %s35, %s42
      %p282 = scmp.eq.s32.totalorder %s281, 0
      %s284 = sadd.s32 %s283, 1
      %s285 = scalar_select %p282, %s283, %s284
      %p288 = pneg %p282
      %p289 = scmp.eq.s32.totalorder %s27, 1
      %p290 = por %p288, %p289
      %p291 = scmp.ne.s32.totalorder %s283, %s286
      %p292 = scmp.eq.s32.totalorder %s27, 0
      %p293 = por %p291, %p292
      %p294 = scmp.ne.s32.totalorder %s283, %s286
      %p295 = scmp.eq.s32.totalorder %s32, 1
      %p296 = por %p294, %p295
      %p297 = scmp.ne.s32.totalorder %s286, %s287
      %p298 = scmp.eq.s32.totalorder %s32, 0
      %p299 = por %p297, %p298
      %p300 = scmp.ne.s32.totalorder %s286, %s287
      %p301 = scmp.eq.s32.totalorder %s33, 1
      %p302 = por %p300, %p301
      %p304 = scmp.ne.s32.totalorder %s287, %s303
      %p305 = scmp.eq.s32.totalorder %s33, 0
      %p306 = por %p304, %p305
      %s308 = sadd.s32 %s307, 1
      %p311 = scmp.eq.s32.totalorder %s27, 1
      %p312 = scmp.ne.s32.totalorder %s307, %s309
      %p313 = scmp.eq.s32.totalorder %s27, 0
      %p314 = por %p312, %p313
      %p315 = scmp.ne.s32.totalorder %s307, %s309
      %p316 = scmp.eq.s32.totalorder %s32, 1
      %p317 = por %p315, %p316
      %p318 = scmp.ne.s32.totalorder %s309, %s310
      %p319 = scmp.eq.s32.totalorder %s32, 0
      %p320 = por %p318, %p319
      %p321 = scmp.ne.s32.totalorder %s309, %s310
      %p322 = scmp.eq.s32.totalorder %s33, 1
      %p323 = por %p321, %p322
      %p325 = scmp.ne.s32.totalorder %s310, %s324
      %p326 = scmp.eq.s32.totalorder %s33, 0
      %p327 = por %p325, %p326
      %s329 = sadd.s32 %s328, 1
      %p332 = scmp.eq.s32.totalorder %s27, 1
      %p333 = scmp.ne.s32.totalorder %s328, %s330
      %p334 = scmp.eq.s32.totalorder %s27, 0
      %p335 = por %p333, %p334
      %p336 = scmp.ne.s32.totalorder %s328, %s330
      %p337 = scmp.eq.s32.totalorder %s32, 1
      %p338 = por %p336, %p337
      %p339 = scmp.ne.s32.totalorder %s330, %s331
      %p340 = scmp.eq.s32.totalorder %s32, 0
      %p341 = por %p339, %p340
      %p342 = scmp.ne.s32.totalorder %s330, %s331
      %p343 = scmp.eq.s32.totalorder %s33, 1
      %p344 = por %p342, %p343
      %p346 = scmp.ne.s32.totalorder %s331, %s345
      %p347 = scmp.eq.s32.totalorder %s33, 0
      %p348 = por %p346, %p347
      %s350 = sadd.s32 %s349, 1
      %p353 = scmp.eq.s32.totalorder %s27, 1
      %p354 = scmp.ne.s32.totalorder %s349, %s351
      %p355 = scmp.eq.s32.totalorder %s27, 0
      %p356 = por %p354, %p355
      %p357 = scmp.ne.s32.totalorder %s349, %s351
      %p358 = scmp.eq.s32.totalorder %s32, 1
      %p359 = por %p357, %p358
      %p360 = scmp.ne.s32.totalorder %s351, %s352
      %p361 = scmp.eq.s32.totalorder %s32, 0
      %p362 = por %p360, %p361
      %p363 = scmp.ne.s32.totalorder %s351, %s352
      %p364 = scmp.eq.s32.totalorder %s33, 1
      %p365 = por %p363, %p364
      %p367 = scmp.ne.s32.totalorder %s352, %s366
      %p368 = scmp.eq.s32.totalorder %s33, 0
      %p369 = por %p367, %p368
      %s370 = ssub.s32 %s34, %s46
      %p371 = scmp.eq.s32.totalorder %s370, 0
      %s373 = sadd.s32 %s372, 1
      %s374 = scalar_select %p371, %s372, %s373
      %p377 = pneg %p371
      %p378 = scmp.eq.s32.totalorder %s27, 1
      %p379 = por %p377, %p378
      %p380 = scmp.ne.s32.totalorder %s372, %s375
      %p381 = scmp.eq.s32.totalorder %s27, 0
      %p382 = por %p380, %p381
      %p383 = scmp.ne.s32.totalorder %s372, %s375
      %p384 = scmp.eq.s32.totalorder %s32, 1
      %p385 = por %p383, %p384
      %p386 = scmp.ne.s32.totalorder %s375, %s376
      %p387 = scmp.eq.s32.totalorder %s32, 0
      %p388 = por %p386, %p387
      %p389 = scmp.ne.s32.totalorder %s375, %s376
      %p390 = scmp.eq.s32.totalorder %s33, 1
      %p391 = por %p389, %p390
      %p393 = scmp.ne.s32.totalorder %s376, %s392
      %p394 = scmp.eq.s32.totalorder %s33, 0
      %p395 = por %p393, %p394
      %s396 = ssub.s32 %s34, %s46
      %p397 = scmp.eq.s32.totalorder %s396, 0
      %s399 = sadd.s32 %s398, 1
      %s400 = scalar_select %p397, %s398, %s399
      %p403 = pneg %p397
      %p404 = scmp.eq.s32.totalorder %s27, 1
      %p405 = por %p403, %p404
      %p406 = scmp.ne.s32.totalorder %s398, %s401
      %p407 = scmp.eq.s32.totalorder %s27, 0
      %p408 = por %p406, %p407
      %p409 = scmp.ne.s32.totalorder %s398, %s401
      %p410 = scmp.eq.s32.totalorder %s32, 1
      %p411 = por %p409, %p410
      %p412 = scmp.ne.s32.totalorder %s401, %s402
      %p413 = scmp.eq.s32.totalorder %s32, 0
      %p414 = por %p412, %p413
      %p415 = scmp.ne.s32.totalorder %s401, %s402
      %p416 = scmp.eq.s32.totalorder %s33, 1
      %p417 = por %p415, %p416
      %p419 = scmp.ne.s32.totalorder %s402, %s418
      %p420 = scmp.eq.s32.totalorder %s33, 0
      %p421 = por %p419, %p420
      %s422 = ssub.s32 %s34, %s46
      %p423 = scmp.eq.s32.totalorder %s422, 0
      %s425 = sadd.s32 %s424, 1
      %s426 = scalar_select %p423, %s424, %s425
      %p429 = pneg %p423
      %p430 = scmp.eq.s32.totalorder %s27, 1
      %p431 = por %p429, %p430
      %p432 = scmp.ne.s32.totalorder %s424, %s427
      %p433 = scmp.eq.s32.totalorder %s27, 0
      %p434 = por %p432, %p433
      %p435 = scmp.ne.s32.totalorder %s424, %s427
      %p436 = scmp.eq.s32.totalorder %s32, 1
      %p437 = por %p435, %p436
      %p438 = scmp.ne.s32.totalorder %s427, %s428
      %p439 = scmp.eq.s32.totalorder %s32, 0
      %p440 = por %p438, %p439
      %p441 = scmp.ne.s32.totalorder %s427, %s428
      %p442 = scmp.eq.s32.totalorder %s33, 1
      %p443 = por %p441, %p442
      %p445 = scmp.ne.s32.totalorder %s428, %s444
      %p446 = scmp.eq.s32.totalorder %s33, 0
      %p447 = por %p445, %p446
      %p448 = scmp.le.s32.totalorder 1, %s27
      %p449 = scmp.lt.s32.totalorder %s27, 3
      %p450 = pnand %p448, %p449
      %p451 = pneg %p450
      // Predicated region
      $region9: #{decoder_forward.1} parent=5 // pred_check
        _
      $region10: #{decoder_forward.1} parent=5 // pred_check_branch
        %453 = sbr.rel (%p450) target = $region12
      $region11: #{decoder_forward.1} parent=5 // pred_region
        %s454 = ssub.s32 %s27, 1
        // Predicated region
        $region13: #{decoder_forward.1} parent=11 // pred_check
          %p455 = pneg %p65
        $region14: #{decoder_forward.1} parent=11 // pred_check_branch
          %457 = sbr.rel (%p455) target = $region16
        $region15: #{decoder_forward.1} parent=11 // pred_region
          %s458 = smul.u32 2, %s36
          %s460 = ssub.s32 256, 256
          %461 = vsyncadd [#allocation4], %s460
          %s462 = smul.addr %s458, 128
          %s463 = scalar_lea.hbm %s0, %s462
          %s464 = sshll.u32 [#allocation3], 4
          %s465 = int_to_ptr.vmem [resolvable:$true] %s464
          %470 = dma.hbm_to_vmem [thread:$0]  %s463, 256, %s465, [#allocation4], 128, 128, 8
        $region16: #{decoder_forward.1} parent=11 // pred_fallthru
          _
        // Predicated region
        $region17: #{decoder_forward.1} parent=11 // pred_check
          %p471 = pneg %p91
        $region18: #{decoder_forward.1} parent=11 // pred_check_branch
          %473 = sbr.rel (%p471) target = $region20
        $region19: #{decoder_forward.1} parent=11 // pred_region
          %s474 = smul.u32 2, %s36
          %s476 = ssub.s32 128, 128
          %477 = vsyncadd [#allocation7], %s476
          %s478 = smul.addr %s474, 64
          %s479 = scalar_lea.hbm %s1, %s478
          %s480 = sshll.u32 [#allocation6], 4
          %s481 = int_to_ptr.vmem [resolvable:$true] %s480
          %486 = dma.hbm_to_vmem [thread:$0]  %s479, 128, %s481, [#allocation7], 64, 64, 4
        $region20: #{decoder_forward.1} parent=11 // pred_fallthru
          _
        // Predicated region
        $region21: #{decoder_forward.1} parent=11 // pred_check
          %p487 = pneg %p320
        $region22: #{decoder_forward.1} parent=11 // pred_check_branch
          %489 = sbr.rel (%p487) target = $region24
        $region23: #{decoder_forward.1} parent=11 // pred_region
          %s491 = ssub.s32 32, 32
          %492 = vsyncadd [#allocation7], %s491
          %s494 = sshll.u32 [#allocation16], 4
          %s495 = int_to_ptr.vmem [resolvable:$true] %s494
          %497 = dma.hbm_to_vmem [thread:$0]  %s10, 32, %s495, [#allocation7]
        $region24: #{decoder_forward.1} parent=11 // pred_fallthru
          _
        // Predicated region
        $region25: #{decoder_forward.1} parent=11 // pred_check
          %p498 = pneg %p341
        $region26: #{decoder_forward.1} parent=11 // pred_check_branch
          %500 = sbr.rel (%p498) target = $region28
        $region27: #{decoder_forward.1} parent=11 // pred_region
          %s502 = ssub.s32 256, 256
          %503 = vsyncadd [#allocation18], %s502
          %s504 = sshll.u32 [#allocation17], 4
          %s505 = int_to_ptr.vmem [resolvable:$true] %s504
          %510 = dma.hbm_to_vmem [thread:$0]  %s11, 256, %s505, [#allocation18], 64, 64, 4
        $region28: #{decoder_forward.1} parent=11 // pred_fallthru
          _
        // Predicated region
        $region29: #{decoder_forward.1} parent=11 // pred_check
          %p511 = pneg %p362
        $region30: #{decoder_forward.1} parent=11 // pred_check_branch
          %513 = sbr.rel (%p511) target = $region32
        $region31: #{decoder_forward.1} parent=11 // pred_region
          %s515 = ssub.s32 16, 16
          %516 = vsyncadd [#allocation18], %s515
          %s518 = sshll.u32 [#allocation19], 4
          %s519 = int_to_ptr.vmem [resolvable:$true] %s518
          %521 = dma.hbm_to_vmem [thread:$0]  %s12, 16, %s519, [#allocation18]
        $region32: #{decoder_forward.1} parent=11 // pred_fallthru
          _
      $region12: #{decoder_forward.1} parent=5 // pred_fallthru
        _
      %p522 = scmp.lt.s32.totalorder %s27, 2
      // Predicated region
      $region33: #{decoder_forward.1} parent=5 // pred_check
        %p523 = pneg %p522
      $region34: #{decoder_forward.1} parent=5 // pred_check_branch
        %525 = sbr.rel (%p523) target = $region36
      $region35: #{decoder_forward.1} parent=5 // pred_region
        // Predicated region
        $region37: #{decoder_forward.1} parent=35 // pred_check
          %p526 = pneg %p111
        $region38: #{decoder_forward.1} parent=35 // pred_check_branch
          %528 = sbr.rel (%p526) target = $region40
        $region39: #{decoder_forward.1} parent=35 // pred_region
          %s529 = sand.u32 %s27, 1
          %s530 = scalar_lea.sflag [#allocation4], %s529
          %s531 = sand.u32 %s101, 1
          %s532 = smul.addr %s531, 16
          %s533 = scalar_lea.vmem [#allocation8], %s532
          %s535 = ssub.s32 256, 256
          %536 = vsyncadd %s530, %s535
          %s537 = smul.addr %s35, 4
          %s538 = smul.addr %s537, 64
          %s539 = scalar_lea.hbm %s2, %s538
          %s540 = sshll.u32 %s533, 4
          %s541 = int_to_ptr.vmem [resolvable:$true] %s540
          %546 = dma.hbm_to_vmem [thread:$0]  %s539, 256, %s541, %s530, 64, 64, 4
        $region40: #{decoder_forward.1} parent=35 // pred_fallthru
          _
        // Predicated region
        $region41: #{decoder_forward.1} parent=35 // pred_check
          %p547 = pneg %p137
        $region42: #{decoder_forward.1} parent=35 // pred_check_branch
          %549 = sbr.rel (%p547) target = $region44
        $region43: #{decoder_forward.1} parent=35 // pred_region
          %s550 = sand.u32 %s27, 1
          %s551 = scalar_lea.sflag [#allocation4], %s550
          %s552 = sand.u32 %s127, 1
          %s553 = smul.addr %s552, 48
          %s554 = scalar_lea.vmem [#allocation9], %s553
          %s556 = ssub.s32 768, 768
          %557 = vsyncadd %s551, %s556
          %s558 = smul.addr %s35, 12
          %s559 = smul.addr %s558, 64
          %s560 = scalar_lea.hbm %s3, %s559
          %s561 = sshll.u32 %s554, 4
          %s562 = int_to_ptr.vmem [resolvable:$true] %s561
          %567 = dma.hbm_to_vmem [thread:$0]  %s560, 768, %s562, %s551, 64, 64, 4
        $region44: #{decoder_forward.1} parent=35 // pred_fallthru
          _
        // Predicated region
        $region45: #{decoder_forward.1} parent=35 // pred_check
          %p568 = pneg %p163
        $region46: #{decoder_forward.1} parent=35 // pred_check_branch
          %570 = sbr.rel (%p568) target = $region48
        $region47: #{decoder_forward.1} parent=35 // pred_region
          %s571 = sand.u32 %s27, 1
          %s572 = scalar_lea.sflag [#allocation4], %s571
          %s573 = sand.u32 %s153, 1
          %s574 = smul.addr %s573, 16
          %s575 = scalar_lea.vmem [#allocation10], %s574
          %s577 = ssub.s32 256, 256
          %578 = vsyncadd %s572, %s577
          %s579 = smul.addr %s35, 4
          %s580 = smul.addr %s579, 64
          %s581 = scalar_lea.hbm %s4, %s580
          %s582 = sshll.u32 %s575, 4
          %s583 = int_to_ptr.vmem [resolvable:$true] %s582
          %588 = dma.hbm_to_vmem [thread:$0]  %s581, 256, %s583, %s572, 64, 64, 4
        $region48: #{decoder_forward.1} parent=35 // pred_fallthru
          _
        // Predicated region
        $region49: #{decoder_forward.1} parent=35 // pred_check
          %p589 = pneg %p189
        $region50: #{decoder_forward.1} parent=35 // pred_check_branch
          %591 = sbr.rel (%p589) target = $region52
        $region51: #{decoder_forward.1} parent=35 // pred_region
          %s592 = sand.u32 %s27, 1
          %s593 = scalar_lea.sflag [#allocation4], %s592
          %s594 = sand.u32 %s179, 1
          %s595 = smul.addr %s594, 16
          %s596 = scalar_lea.vmem [#allocation11], %s595
          %s598 = ssub.s32 256, 256
          %599 = vsyncadd %s593, %s598
          %s600 = smul.addr %s35, 4
          %s601 = smul.addr %s600, 64
          %s602 = scalar_lea.hbm %s5, %s601
          %s603 = sshll.u32 %s596, 4
          %s604 = int_to_ptr.vmem [resolvable:$true] %s603
          %609 = dma.hbm_to_vmem [thread:$0]  %s602, 256, %s604, %s593, 64, 64, 4
        $region52: #{decoder_forward.1} parent=35 // pred_fallthru
          _
        // Predicated region
        $region53: #{decoder_forward.1} parent=35 // pred_check
          %p610 = pneg %p215
        $region54: #{decoder_forward.1} parent=35 // pred_check_branch
          %612 = sbr.rel (%p610) target = $region56
        $region55: #{decoder_forward.1} parent=35 // pred_region
          %s613 = sand.u32 %s27, 1
          %s614 = scalar_lea.sflag [#allocation4], %s613
          %s615 = sand.u32 %s205, 1
          %s616 = scalar_lea.vmem [#allocation12], %s615
          %s618 = ssub.s32 16, 16
          %619 = vsyncadd %s614, %s618
          %s620 = smul.addr %s35, 16
          %s621 = scalar_lea.hbm %s6, %s620
          %s623 = sshll.u32 %s616, 4
          %s624 = int_to_ptr.vmem [resolvable:$true] %s623
          %626 = dma.hbm_to_vmem [thread:$0]  %s621, 16, %s624, %s614
        $region56: #{decoder_forward.1} parent=35 // pred_fallthru
          _
        // Predicated region
        $region57: #{decoder_forward.1} parent=35 // pred_check
          %p627 = pneg %p241
        $region58: #{decoder_forward.1} parent=35 // pred_check_branch
          %629 = sbr.rel (%p627) target = $region60
        $region59: #{decoder_forward.1} parent=35 // pred_region
          %s630 = sand.u32 %s27, 1
          %s631 = scalar_lea.sflag [#allocation4], %s630
          %s632 = sand.u32 %s231, 1
          %s633 = smul.addr %s632, 32
          %s634 = scalar_lea.vmem [#allocation13], %s633
          %s636 = ssub.s32 512, 512
          %637 = vsyncadd %s631, %s636
          %s638 = smul.addr %s35, 8
          %s639 = smul.addr %s638, 64
          %s640 = scalar_lea.hbm %s7, %s639
          %s641 = sshll.u32 %s634, 4
          %s642 = int_to_ptr.vmem [resolvable:$true] %s641
          %647 = dma.hbm_to_vmem [thread:$0]  %s640, 512, %s642, %s631, 64, 64, 4
        $region60: #{decoder_forward.1} parent=35 // pred_fallthru
          _
        // Predicated region
        $region61: #{decoder_forward.1} parent=35 // pred_check
          %p648 = pneg %p267
        $region62: #{decoder_forward.1} parent=35 // pred_check_branch
          %650 = sbr.rel (%p648) target = $region64
        $region63: #{decoder_forward.1} parent=35 // pred_region
          %s651 = sand.u32 %s27, 1
          %s652 = scalar_lea.sflag [#allocation4], %s651
          %s653 = sand.u32 %s257, 1
          %s654 = scalar_lea.vmem [#allocation14], %s653
          %s656 = ssub.s32 16, 16
          %657 = vsyncadd %s652, %s656
          %s658 = smul.addr %s35, 16
          %s659 = scalar_lea.hbm %s8, %s658
          %s661 = sshll.u32 %s654, 4
          %s662 = int_to_ptr.vmem [resolvable:$true] %s661
          %664 = dma.hbm_to_vmem [thread:$0]  %s659, 16, %s662, %s652
        $region64: #{decoder_forward.1} parent=35 // pred_fallthru
          _
        // Predicated region
        $region65: #{decoder_forward.1} parent=35 // pred_check
          %p665 = pneg %p293
        $region66: #{decoder_forward.1} parent=35 // pred_check_branch
          %667 = sbr.rel (%p665) target = $region68
        $region67: #{decoder_forward.1} parent=35 // pred_region
          %s668 = sand.u32 %s27, 1
          %s669 = scalar_lea.sflag [#allocation4], %s668
          %s670 = sand.u32 %s283, 1
          %s671 = smul.addr %s670, 8
          %s672 = scalar_lea.vmem [#allocation15], %s671
          %s674 = ssub.s32 128, 128
          %675 = vsyncadd %s669, %s674
          %s676 = smul.addr %s35, 128
          %s677 = scalar_lea.hbm %s9, %s676
          %s679 = sshll.u32 %s672, 4
          %s680 = int_to_ptr.vmem [resolvable:$true] %s679
          %682 = dma.hbm_to_vmem [thread:$0]  %s677, 128, %s680, %s669
        $region68: #{decoder_forward.1} parent=35 // pred_fallthru
          _
      $region36: #{decoder_forward.1} parent=5 // pred_fallthru
        _
      %p683 = scmp.le.s32.totalorder 1, %s27
      %p684 = scmp.lt.s32.totalorder %s27, 3
      %p685 = pnand %p683, %p684
      %p686 = pneg %p685
      // Predicated region
      $region69: #{decoder_forward.1} parent=5 // pred_check
        _
      $region70: #{decoder_forward.1} parent=5 // pred_check_branch
        %688 = sbr.rel (%p685) target = $region72
      $region71: #{decoder_forward.1} parent=5 // pred_region
        %s689 = ssub.s32 %s27, 1
        // Predicated region
        $region73: #{decoder_forward.1} parent=71 // pred_check
          %p690 = pneg %p65
        $region74: #{decoder_forward.1} parent=71 // pred_check_branch
          %692 = sbr.rel (%p690) target = $region76
        $region75: #{decoder_forward.1} parent=71 // pred_region
          %693 = dma.done [#allocation4], 256
        $region76: #{decoder_forward.1} parent=71 // pred_fallthru
          _
        // Predicated region
        $region77: #{decoder_forward.1} parent=71 // pred_check
          %p694 = pneg %p91
        $region78: #{decoder_forward.1} parent=71 // pred_check_branch
          %696 = sbr.rel (%p694) target = $region80
        $region79: #{decoder_forward.1} parent=71 // pred_region
          %697 = dma.done [#allocation7], 128
        $region80: #{decoder_forward.1} parent=71 // pred_fallthru
          _
        %s698 = sand.u32 %s32, 1
        %s699 = scalar_lea.sflag [#allocation4], %s698
        %s700 = sand.u32 %s104, 1
        %s701 = smul.addr %s700, 16
        %s702 = scalar_lea.vmem [#allocation8], %s701
        // Predicated region
        $region81: #{decoder_forward.1} parent=71 // pred_check
          %p703 = pneg %p117
        $region82: #{decoder_forward.1} parent=71 // pred_check_branch
          %705 = sbr.rel (%p703) target = $region84
        $region83: #{decoder_forward.1} parent=71 // pred_region
          %706 = dma.done %s699, 256
        $region84: #{decoder_forward.1} parent=71 // pred_fallthru
          _
        %s707 = sand.u32 %s32, 1
        %s708 = scalar_lea.sflag [#allocation4], %s707
        %s709 = sand.u32 %s130, 1
        %s710 = smul.addr %s709, 48
        %s711 = scalar_lea.vmem [#allocation9], %s710
        // Predicated region
        $region85: #{decoder_forward.1} parent=71 // pred_check
          %p712 = pneg %p143
        $region86: #{decoder_forward.1} parent=71 // pred_check_branch
          %714 = sbr.rel (%p712) target = $region88
        $region87: #{decoder_forward.1} parent=71 // pred_region
          %715 = dma.done %s708, 768
        $region88: #{decoder_forward.1} parent=71 // pred_fallthru
          _
        %s716 = sand.u32 %s32, 1
        %s717 = scalar_lea.sflag [#allocation4], %s716
        %s718 = sand.u32 %s156, 1
        %s719 = smul.addr %s718, 16
        %s720 = scalar_lea.vmem [#allocation10], %s719
        // Predicated region
        $region89: #{decoder_forward.1} parent=71 // pred_check
          %p721 = pneg %p169
        $region90: #{decoder_forward.1} parent=71 // pred_check_branch
          %723 = sbr.rel (%p721) target = $region92
        $region91: #{decoder_forward.1} parent=71 // pred_region
          %724 = dma.done %s717, 256
        $region92: #{decoder_forward.1} parent=71 // pred_fallthru
          _
        %s725 = sand.u32 %s32, 1
        %s726 = scalar_lea.sflag [#allocation4], %s725
        %s727 = sand.u32 %s182, 1
        %s728 = smul.addr %s727, 16
        %s729 = scalar_lea.vmem [#allocation11], %s728
        // Predicated region
        $region93: #{decoder_forward.1} parent=71 // pred_check
          %p730 = pneg %p195
        $region94: #{decoder_forward.1} parent=71 // pred_check_branch
          %732 = sbr.rel (%p730) target = $region96
        $region95: #{decoder_forward.1} parent=71 // pred_region
          %733 = dma.done %s726, 256
        $region96: #{decoder_forward.1} parent=71 // pred_fallthru
          _
        %s734 = sand.u32 %s32, 1
        %s735 = scalar_lea.sflag [#allocation4], %s734
        %s736 = sand.u32 %s208, 1
        %s737 = scalar_lea.vmem [#allocation12], %s736
        // Predicated region
        $region97: #{decoder_forward.1} parent=71 // pred_check
          %p738 = pneg %p221
        $region98: #{decoder_forward.1} parent=71 // pred_check_branch
          %740 = sbr.rel (%p738) target = $region100
        $region99: #{decoder_forward.1} parent=71 // pred_region
          %741 = dma.done %s735, 16
        $region100: #{decoder_forward.1} parent=71 // pred_fallthru
          _
        %s742 = sand.u32 %s32, 1
        %s743 = scalar_lea.sflag [#allocation4], %s742
        %s744 = sand.u32 %s234, 1
        %s745 = smul.addr %s744, 32
        %s746 = scalar_lea.vmem [#allocation13], %s745
        // Predicated region
        $region101: #{decoder_forward.1} parent=71 // pred_check
          %p747 = pneg %p247
        $region102: #{decoder_forward.1} parent=71 // pred_check_branch
          %749 = sbr.rel (%p747) target = $region104
        $region103: #{decoder_forward.1} parent=71 // pred_region
          %750 = dma.done %s743, 512
        $region104: #{decoder_forward.1} parent=71 // pred_fallthru
          _
        %s751 = sand.u32 %s32, 1
        %s752 = scalar_lea.sflag [#allocation4], %s751
        %s753 = sand.u32 %s260, 1
        %s754 = scalar_lea.vmem [#allocation14], %s753
        // Predicated region
        $region105: #{decoder_forward.1} parent=71 // pred_check
          %p755 = pneg %p273
        $region106: #{decoder_forward.1} parent=71 // pred_check_branch
          %757 = sbr.rel (%p755) target = $region108
        $region107: #{decoder_forward.1} parent=71 // pred_region
          %758 = dma.done %s752, 16
        $region108: #{decoder_forward.1} parent=71 // pred_fallthru
          _
        %s759 = sand.u32 %s32, 1
        %s760 = scalar_lea.sflag [#allocation4], %s759
        %s761 = sand.u32 %s286, 1
        %s762 = smul.addr %s761, 8
        %s763 = scalar_lea.vmem [#allocation15], %s762
        // Predicated region
        $region109: #{decoder_forward.1} parent=71 // pred_check
          %p764 = pneg %p299
        $region110: #{decoder_forward.1} parent=71 // pred_check_branch
          %766 = sbr.rel (%p764) target = $region112
        $region111: #{decoder_forward.1} parent=71 // pred_region
          %767 = dma.done %s760, 128
        $region112: #{decoder_forward.1} parent=71 // pred_fallthru
          _
        // Predicated region
        $region113: #{decoder_forward.1} parent=71 // pred_check
          %p768 = pneg %p320
        $region114: #{decoder_forward.1} parent=71 // pred_check_branch
          %770 = sbr.rel (%p768) target = $region116
        $region115: #{decoder_forward.1} parent=71 // pred_region
          %771 = dma.done [#allocation7], 32
        $region116: #{decoder_forward.1} parent=71 // pred_fallthru
          _
        // Predicated region
        $region117: #{decoder_forward.1} parent=71 // pred_check
          %p772 = pneg %p341
        $region118: #{decoder_forward.1} parent=71 // pred_check_branch
          %774 = sbr.rel (%p772) target = $region120
        $region119: #{decoder_forward.1} parent=71 // pred_region
          %775 = dma.done [#allocation18], 256
        $region120: #{decoder_forward.1} parent=71 // pred_fallthru
          _
        // Predicated region
        $region121: #{decoder_forward.1} parent=71 // pred_check
          %p776 = pneg %p362
        $region122: #{decoder_forward.1} parent=71 // pred_check_branch
          %778 = sbr.rel (%p776) target = $region124
        $region123: #{decoder_forward.1} parent=71 // pred_region
          %779 = dma.done [#allocation18], 16
        $region124: #{decoder_forward.1} parent=71 // pred_fallthru
          _
        %p780 = pneg %p65
        %p781 = pneg %p62
        %p782 = pneg %p91
        %p783 = pneg %p88
        %s784 = sand.u32 %s32, 1
        %s785 = scalar_lea.sflag [#allocation4], %s784
        %s786 = sand.u32 %s104, 1
        %s787 = smul.addr %s786, 16
        %s788 = scalar_lea.vmem [#allocation8], %s787
        %p789 = pneg %p117
        %p790 = pneg %p114
        %s791 = sand.u32 %s32, 1
        %s792 = scalar_lea.sflag [#allocation4], %s791
        %s793 = sand.u32 %s130, 1
        %s794 = smul.addr %s793, 48
        %s795 = scalar_lea.vmem [#allocation9], %s794
        %p796 = pneg %p143
        %p797 = pneg %p140
        %s798 = sand.u32 %s32, 1
        %s799 = scalar_lea.sflag [#allocation4], %s798
        %s800 = sand.u32 %s156, 1
        %s801 = smul.addr %s800, 16
        %s802 = scalar_lea.vmem [#allocation10], %s801
        %p803 = pneg %p169
        %p804 = pneg %p166
        %s805 = sand.u32 %s32, 1
        %s806 = scalar_lea.sflag [#allocation4], %s805
        %s807 = sand.u32 %s182, 1
        %s808 = smul.addr %s807, 16
        %s809 = scalar_lea.vmem [#allocation11], %s808
        %p810 = pneg %p195
        %p811 = pneg %p192
        %s812 = sand.u32 %s32, 1
        %s813 = scalar_lea.sflag [#allocation4], %s812
        %s814 = sand.u32 %s208, 1
        %s815 = scalar_lea.vmem [#allocation12], %s814
        %p816 = pneg %p221
        %p817 = pneg %p218
        %s818 = sand.u32 %s32, 1
        %s819 = scalar_lea.sflag [#allocation4], %s818
        %s820 = sand.u32 %s234, 1
        %s821 = smul.addr %s820, 32
        %s822 = scalar_lea.vmem [#allocation13], %s821
        %p823 = pneg %p247
        %p824 = pneg %p244
        %s825 = sand.u32 %s32, 1
        %s826 = scalar_lea.sflag [#allocation4], %s825
        %s827 = sand.u32 %s260, 1
        %s828 = scalar_lea.vmem [#allocation14], %s827
        %p829 = pneg %p273
        %p830 = pneg %p270
        %s831 = sand.u32 %s32, 1
        %s832 = scalar_lea.sflag [#allocation4], %s831
        %s833 = sand.u32 %s286, 1
        %s834 = smul.addr %s833, 8
        %s835 = scalar_lea.vmem [#allocation15], %s834
        %p836 = pneg %p299
        %p837 = pneg %p296
        %p838 = pneg %p320
        %p839 = pneg %p317
        %p840 = pneg %p341
        %p841 = pneg %p338
        %p842 = pneg %p362
        %p843 = pneg %p359
        %p844 = pneg %p388
        %p845 = pneg %p385
        %p846 = pneg %p414
        %p847 = pneg %p411
        %p848 = pneg %p440
        %p849 = pneg %p437
        %s850 = smul.u32 2, %s36
        %s851 = smul.u32 2, %s36
        %s852 = smul.u32 2, %s36
        %p854 = scmp.eq.s32.totalorder %s37, 0
        // Predicated region
        $region125: #{decoder_forward.1} parent=71 // pred_check
          %p855 = pneg %p854
        $region126: #{decoder_forward.1} parent=71 // pred_check_branch
          %857 = sbr.rel (%p855) target = $region128
        $region127: #{decoder_forward.1} parent=71 // pred_region
          %v858 = vld [vmem:[#allocation3] sm:$0xff]
          %v859 = vld [vmem:[#allocation3 + $0x8] sm:$0xff]
          %vm860 = vcmask 261120
          %861 = vst.msk [vmem:[#allocation2] sm:$0xff] %vm860, %v858
          %862 = vst.msk [vmem:[#allocation2 + $0x8] sm:$0xff] %vm860, %v859
          %863 = vst [vmem:[#allocation21] sm:$0xff] 0.0
          %864 = vst [vmem:[#allocation23] sm:$0xff] 0.0
        $region128: #{decoder_forward.1} parent=71 // pred_fallthru
          _
        %v865 = vld [vmem:[#allocation2] sm:$0xff]
        %v866 = vld [vmem:[#allocation2 + $0x8] sm:$0xff]
        %v867 = vld [vmem:[#allocation6] sm:$0xf]
        %v868 = vld [vmem:[#allocation6 + $0x4] sm:$0xf]
        %v869 = vld [vmem:[%s763] sm:$0x3f]
        %v870 = vpack.c.bf16 %v866, %v865
        %v871 = vld [vmem:[%s702] sm:$0xf]
        %v872 = vld [vmem:[%s702 + $0x4] sm:$0xf]
        %v873 = vld [vmem:[%s702 + $0x8] sm:$0xf]
        %v874 = vld [vmem:[%s702 + $0xc] sm:$0xf]
        %v879 = vunpack.c.l.b16 %v871
        %v880 = vunpack.c.l.b16 %v872
        %v881 = vunpack.c.l.b16 %v873
        %v882 = vunpack.c.l.b16 %v874
        %v883 = vpack.c.b16 %v880, %v879
        %v884 = vpack.c.b16 %v882, %v881
        %vm887 = vcmask 261120
        %v889 = vsel %vm887, %v870, 0
        %891 = vmatprep.subr.bf16.mxu0 0
        %892 = vmatpush1.bf16.msra.mxu0 %v883
        %893 = vmatprep.subr.bf16.mxu0 0
        %894 = vmatpush1.bf16.msra.mxu0 %v884
        %895 = vmatprep.subr.bf16.mxu0 0
        %896 = vmatpush1.bf16.msra.mxu0 0
        %897 = vmatprep.subr.bf16.mxu0 0
        %898 = vmatpush1.bf16.msra.mxu0 0
        %899 = vmatprep.subr.bf16.mxu0 0
        %900 = vmatpush1.bf16.msra.mxu0 0
        %901 = vmatprep.subr.bf16.mxu0 0
        %902 = vmatpush1.bf16.msra.mxu0 0
        %903 = vmatprep.subr.bf16.mxu0 0
        %904 = vmatpush1.bf16.msra.mxu0 0
        %905 = vmatprep.subr.bf16.mxu0 0
        %906 = vmatpush1.bf16.msra.mxu0 0
        %907 = vmatprep.subr.bf16.mxu0 0
        %908 = vmatpush1.bf16.msra.mxu0 0
        %909 = vmatprep.subr.bf16.mxu0 0
        %910 = vmatpush1.bf16.msra.mxu0 0
        %911 = vmatprep.subr.bf16.mxu0 0
        %912 = vmatpush1.bf16.msra.mxu0 0
        %913 = vmatprep.subr.bf16.mxu0 0
        %914 = vmatpush1.bf16.msra.mxu0 0
        %915 = vmatprep.subr.bf16.mxu0 0
        %916 = vmatpush1.bf16.msra.mxu0 0
        %917 = vmatprep.subr.bf16.mxu0 0
        %918 = vmatpush1.bf16.msra.mxu0 0
        %919 = vmatprep.subr.bf16.mxu0 0
        %920 = vmatpush1.bf16.msra.mxu0 0
        %921 = vmatprep.subr.bf16.mxu0 0
        %922 = vmatpush1.bf16.msra.mxu0 0
        %923 = vmatprep.mubr.bf16.mxu0 0
        %924 = vmatmul.mubr.bf16.gmra.mrb[0].mxu0 %v889
        %v925 = vpop.f32.mrb[0].mxu0
        %v926 = vadd.f32 0.0, %v925
        %v927 = vpop.f32.mrb[0].mxu0
        %v928 = vpop.f32.mrb[0].mxu0
        %v929 = vadd.f32 0.0, %v928
        %v930 = vpop.f32.mrb[0].mxu0
        %931 = vdwg.mxu0
        %v932 = vpack.c.bf16 %v926, %v926
        %v933 = vpack.c.bf16 %v929, %v929
        %935 = vrot.lane.b32.xlu0 %v932, 96
        %v936 = vpop.permute.xlu0 %935
        %v938 = vsel %vm887, %v932, 0
        %v941 = vsel %vm887, %v936, 0
        %943 = vmatprep.subr.bf16.mxu0 0
        %944 = vmatpush1.bf16.xpose.msra.mxu0 %v941
        %945 = vmatprep.subr.bf16.mxu0 0
        %946 = vmatpush1.bf16.xpose.msra.mxu0 0
        %947 = vmatprep.subr.bf16.mxu0 0
        %948 = vmatpush1.bf16.xpose.msra.mxu0 0
        %949 = vmatprep.subr.bf16.mxu0 0
        %950 = vmatpush1.bf16.xpose.msra.mxu0 0
        %951 = vmatprep.subr.bf16.mxu0 0
        %952 = vmatpush1.bf16.xpose.msra.mxu0 0
        %953 = vmatprep.subr.bf16.mxu0 0
        %954 = vmatpush1.bf16.xpose.msra.mxu0 0
        %955 = vmatprep.subr.bf16.mxu0 0
        %956 = vmatpush1.bf16.xpose.msra.mxu0 0
        %957 = vmatprep.subr.bf16.mxu0 0
        %958 = vmatpush1.bf16.xpose.msra.mxu0 0
        %959 = vmatprep.subr.bf16.mxu0 0
        %960 = vmatpush1.bf16.xpose.msra.mxu0 0
        %961 = vmatprep.subr.bf16.mxu0 0
        %962 = vmatpush1.bf16.xpose.msra.mxu0 0
        %963 = vmatprep.subr.bf16.mxu0 0
        %964 = vmatpush1.bf16.xpose.msra.mxu0 0
        %965 = vmatprep.subr.bf16.mxu0 0
        %966 = vmatpush1.bf16.xpose.msra.mxu0 0
        %967 = vmatprep.subr.bf16.mxu0 0
        %968 = vmatpush1.bf16.xpose.msra.mxu0 0
        %969 = vmatprep.subr.bf16.mxu0 0
        %970 = vmatpush1.bf16.xpose.msra.mxu0 0
        %971 = vmatprep.subr.bf16.mxu0 0
        %972 = vmatpush1.bf16.xpose.msra.mxu0 0
        %973 = vmatprep.subr.bf16.mxu0 0
        %974 = vmatpush1.bf16.xpose.msra.mxu0 0
        %975 = vmatprep.mubr.bf16.mxu0 0
        %976 = vmatmul.mubr.bf16.gmra.mrb[0].mxu0 %v938
        %v977 = vpop.f32.mrb[0].mxu0
        %v978 = vadd.f32 0.0, %v977
        %v979 = vpop.f32.mrb[0].mxu0
        %v980 = vpop.f32.mrb[0].mxu0
        %v981 = vpop.f32.mrb[0].mxu0
        %982 = vdwg.mxu0
        %984 = vrot.lane.b32.xlu0 %v933, 96
        %v985 = vpop.permute.xlu0 %984
        %v987 = vsel %vm887, %v933, 0
        %v990 = vsel %vm887, %v985, 0
        %992 = vmatprep.subr.bf16.mxu0 0
        %993 = vmatpush1.bf16.xpose.msra.mxu0 %v990
        %994 = vmatprep.subr.bf16.mxu0 0
        %995 = vmatpush1.bf16.xpose.msra.mxu0 0
        %996 = vmatprep.subr.bf16.mxu0 0
        %997 = vmatpush1.bf16.xpose.msra.mxu0 0
        %998 = vmatprep.subr.bf16.mxu0 0
        %999 = vmatpush1.bf16.xpose.msra.mxu0 0
        %1000 = vmatprep.subr.bf16.mxu0 0
        %1001 = vmatpush1.bf16.xpose.msra.mxu0 0
        %1002 = vmatprep.subr.bf16.mxu0 0
        %1003 = vmatpush1.bf16.xpose.msra.mxu0 0
        %1004 = vmatprep.subr.bf16.mxu0 0
        %1005 = vmatpush1.bf16.xpose.msra.mxu0 0
        %1006 = vmatprep.subr.bf16.mxu0 0
        %1007 = vmatpush1.bf16.xpose.msra.mxu0 0
        %1008 = vmatprep.subr.bf16.mxu0 0
        %1009 = vmatpush1.bf16.xpose.msra.mxu0 0
        %1010 = vmatprep.subr.bf16.mxu0 0
        %1011 = vmatpush1.bf16.xpose.msra.mxu0 0
        %1012 = vmatprep.subr.bf16.mxu0 0
        %1013 = vmatpush1.bf16.xpose.msra.mxu0 0
        %1014 = vmatprep.subr.bf16.mxu0 0
        %1015 = vmatpush1.bf16.xpose.msra.mxu0 0
        %1016 = vmatprep.subr.bf16.mxu0 0
        %1017 = vmatpush1.bf16.xpose.msra.mxu0 0
        %1018 = vmatprep.subr.bf16.mxu0 0
        %1019 = vmatpush1.bf16.xpose.msra.mxu0 0
        %1020 = vmatprep.subr.bf16.mxu0 0
        %1021 = vmatpush1.bf16.xpose.msra.mxu0 0
        %1022 = vmatprep.subr.bf16.mxu0 0
        %1023 = vmatpush1.bf16.xpose.msra.mxu0 0
        %1024 = vmatprep.mubr.bf16.mxu0 0
        %1025 = vmatmul.mubr.bf16.gmra.mrb[0].mxu0 %v987
        %v1026 = vpop.f32.mrb[0].mxu0
        %v1027 = vadd.f32 0.0, %v1026
        %v1028 = vpop.f32.mrb[0].mxu0
        %v1029 = vpop.f32.mrb[0].mxu0
        %v1030 = vpop.f32.mrb[0].mxu0
        %1031 = vdwg.mxu0
        %vm1032 = vcmask 64512
        %v1033 = vsel %vm1032, %v978, -inf
        %1034 = vmax.xlane.f32.xlu0 %v1033
        %v1035 = vpop.xlane.xlu0 %1034
        %v1036 = vsel %vm1032, %v1027, -inf
        %1037 = vmax.xlane.f32.xlu0 %v1036
        %v1038 = vpop.xlane.xlu0 %1037
        %v1039 = vsub.f32 %v978, %v1035
        %v1040 = vsub.f32 %v1027, %v1038
        %v1041 = vmul.f32 %v1039, 1.442695
        %v1042 = vpow.pop %v1041
        %v1043 = vmul.f32 %v1040, 1.442695
        %v1044 = vpow.pop %v1043
        %v1045 = vsel %vm1032, %v1042, 0.0
        %1046 = vadd.xlane.f32.xlu0 %v1045
        %v1047 = vpop.xlane.xlu0 %1046
        %v1048 = vsel %vm1032, %v1044, 0.0
        %1049 = vadd.xlane.f32.xlu0 %v1048
        %v1050 = vpop.xlane.xlu0 %1049
        %v1051 = vrcp.pop %v1047
        %v1052 = vrcp.pop %v1050
        %v1053 = vmul.f32 %v1042, %v1051
        %v1054 = vmul.f32 %v1044, %v1052
        %v1055 = vpack.c.bf16 %v1053, %v1053
        %v1056 = vpack.c.bf16 %v1054, %v1054
        %1057 = vrot.lane.b32.xlu0 %v932, 64
        %v1058 = vpop.permute.xlu0 %1057
        %v1060 = vsel %vm1032, %v1055, 0
        %vm1062 = vcmask 1043456
        %v1064 = vsel %vm1062, %v1058, 0
        %1066 = vmatprep.subr.bf16.mxu0 0
        %1067 = vmatpush1.bf16.msra.mxu0 %v1064
        %1068 = vmatprep.subr.bf16.mxu0 0
        %1069 = vmatpush1.bf16.msra.mxu0 0
        %1070 = vmatprep.subr.bf16.mxu0 0
        %1071 = vmatpush1.bf16.msra.mxu0 0
        %1072 = vmatprep.subr.bf16.mxu0 0
        %1073 = vmatpush1.bf16.msra.mxu0 0
        %1074 = vmatprep.subr.bf16.mxu0 0
        %1075 = vmatpush1.bf16.msra.mxu0 0
        %1076 = vmatprep.subr.bf16.mxu0 0
        %1077 = vmatpush1.bf16.msra.mxu0 0
        %1078 = vmatprep.subr.bf16.mxu0 0
        %1079 = vmatpush1.bf16.msra.mxu0 0
        %1080 = vmatprep.subr.bf16.mxu0 0
        %1081 = vmatpush1.bf16.msra.mxu0 0
        %1082 = vmatprep.subr.bf16.mxu0 0
        %1083 = vmatpush1.bf16.msra.mxu0 0
        %1084 = vmatprep.subr.bf16.mxu0 0
        %1085 = vmatpush1.bf16.msra.mxu0 0
        %1086 = vmatprep.subr.bf16.mxu0 0
        %1087 = vmatpush1.bf16.msra.mxu0 0
        %1088 = vmatprep.subr.bf16.mxu0 0
        %1089 = vmatpush1.bf16.msra.mxu0 0
        %1090 = vmatprep.subr.bf16.mxu0 0
        %1091 = vmatpush1.bf16.msra.mxu0 0
        %1092 = vmatprep.subr.bf16.mxu0 0
        %1093 = vmatpush1.bf16.msra.mxu0 0
        %1094 = vmatprep.subr.bf16.mxu0 0
        %1095 = vmatpush1.bf16.msra.mxu0 0
        %1096 = vmatprep.subr.bf16.mxu0 0
        %1097 = vmatpush1.bf16.msra.mxu0 0
        %1098 = vmatprep.mubr.bf16.mxu0 0
        %1099 = vmatmul.mubr.bf16.gmra.mrb[0].mxu0 %v1060
        %v1100 = vpop.f32.mrb[0].mxu0
        %v1101 = vadd.f32 0.0, %v1100
        %v1102 = vpop.f32.mrb[0].mxu0
        %v1103 = vpop.f32.mrb[0].mxu0
        %v1104 = vpop.f32.mrb[0].mxu0
        %1105 = vdwg.mxu0
        %1106 = vrot.lane.b32.xlu0 %v933, 64
        %v1107 = vpop.permute.xlu0 %1106
        %v1109 = vsel %vm1032, %v1056, 0
        %v1112 = vsel %vm1062, %v1107, 0
        %1114 = vmatprep.subr.bf16.mxu0 0
        %1115 = vmatpush1.bf16.msra.mxu0 %v1112
        %1116 = vmatprep.subr.bf16.mxu0 0
        %1117 = vmatpush1.bf16.msra.mxu0 0
        %1118 = vmatprep.subr.bf16.mxu0 0
        %1119 = vmatpush1.bf16.msra.mxu0 0
        %1120 = vmatprep.subr.bf16.mxu0 0
        %1121 = vmatpush1.bf16.msra.mxu0 0
        %1122 = vmatprep.subr.bf16.mxu0 0
        %1123 = vmatpush1.bf16.msra.mxu0 0
        %1124 = vmatprep.subr.bf16.mxu0 0
        %1125 = vmatpush1.bf16.msra.mxu0 0
        %1126 = vmatprep.subr.bf16.mxu0 0
        %1127 = vmatpush1.bf16.msra.mxu0 0
        %1128 = vmatprep.subr.bf16.mxu0 0
        %1129 = vmatpush1.bf16.msra.mxu0 0
        %1130 = vmatprep.subr.bf16.mxu0 0
        %1131 = vmatpush1.bf16.msra.mxu0 0
        %1132 = vmatprep.subr.bf16.mxu0 0
        %1133 = vmatpush1.bf16.msra.mxu0 0
        %1134 = vmatprep.subr.bf16.mxu0 0
        %1135 = vmatpush1.bf16.msra.mxu0 0
        %1136 = vmatprep.subr.bf16.mxu0 0
        %1137 = vmatpush1.bf16.msra.mxu0 0
        %1138 = vmatprep.subr.bf16.mxu0 0
        %1139 = vmatpush1.bf16.msra.mxu0 0
        %1140 = vmatprep.subr.bf16.mxu0 0
        %1141 = vmatpush1.bf16.msra.mxu0 0
        %1142 = vmatprep.subr.bf16.mxu0 0
        %1143 = vmatpush1.bf16.msra.mxu0 0
        %1144 = vmatprep.subr.bf16.mxu0 0
        %1145 = vmatpush1.bf16.msra.mxu0 0
        %1146 = vmatprep.mubr.bf16.mxu0 0
        %1147 = vmatmul.mubr.bf16.gmra.mrb[0].mxu0 %v1109
        %v1148 = vpop.f32.mrb[0].mxu0
        %v1149 = vadd.f32 0.0, %v1148
        %v1150 = vpop.f32.mrb[0].mxu0
        %v1151 = vpop.f32.mrb[0].mxu0
        %v1152 = vpop.f32.mrb[0].mxu0
        %1153 = vdwg.mxu0
        %v1154 = vpack.c.bf16 %v1149, %v1101
        %v1155 = vld [vmem:[%s711] sm:$0xf]
        %v1156 = vld [vmem:[%s711 + $0x4] sm:$0xf]
        %v1157 = vld [vmem:[%s711 + $0x8] sm:$0xf]
        %v1158 = vld [vmem:[%s711 + $0xc] sm:$0xf]
        %v1163 = vunpack.c.l.b16 %v1155
        %v1164 = vunpack.c.l.b16 %v1156
        %v1165 = vunpack.c.l.b16 %v1157
        %v1166 = vunpack.c.l.b16 %v1158
        %v1167 = vpack.c.b16 %v1164, %v1163
        %v1168 = vpack.c.b16 %v1166, %v1165
        %v1172 = vsel %vm887, %v1154, 0
        %1174 = vmatprep.subr.bf16.mxu0 0
        %1175 = vmatpush1.bf16.msra.mxu0 %v1167
        %1176 = vmatprep.subr.bf16.mxu0 0
        %1177 = vmatpush1.bf16.msra.mxu0 %v1168
        %1178 = vmatprep.subr.bf16.mxu0 0
        %1179 = vmatpush1.bf16.msra.mxu0 0
        %1180 = vmatprep.subr.bf16.mxu0 0
        %1181 = vmatpush1.bf16.msra.mxu0 0
        %1182 = vmatprep.subr.bf16.mxu0 0
        %1183 = vmatpush1.bf16.msra.mxu0 0
        %1184 = vmatprep.subr.bf16.mxu0 0
        %1185 = vmatpush1.bf16.msra.mxu0 0
        %1186 = vmatprep.subr.bf16.mxu0 0
        %1187 = vmatpush1.bf16.msra.mxu0 0
        %1188 = vmatprep.subr.bf16.mxu0 0
        %1189 = vmatpush1.bf16.msra.mxu0 0
        %1190 = vmatprep.subr.bf16.mxu0 0
        %1191 = vmatpush1.bf16.msra.mxu0 0
        %1192 = vmatprep.subr.bf16.mxu0 0
        %1193 = vmatpush1.bf16.msra.mxu0 0
        %1194 = vmatprep.subr.bf16.mxu0 0
        %1195 = vmatpush1.bf16.msra.mxu0 0
        %1196 = vmatprep.subr.bf16.mxu0 0
        %1197 = vmatpush1.bf16.msra.mxu0 0
        %1198 = vmatprep.subr.bf16.mxu0 0
        %1199 = vmatpush1.bf16.msra.mxu0 0
        %1200 = vmatprep.subr.bf16.mxu0 0
        %1201 = vmatpush1.bf16.msra.mxu0 0
        %1202 = vmatprep.subr.bf16.mxu0 0
        %1203 = vmatpush1.bf16.msra.mxu0 0
        %1204 = vmatprep.subr.bf16.mxu0 0
        %1205 = vmatpush1.bf16.msra.mxu0 0
        %1206 = vmatprep.mubr.bf16.mxu0 0
        %1207 = vmatmul.mubr.bf16.gmra.mrb[0].mxu0 %v1172
        %v1208 = vpop.f32.mrb[0].mxu0
        %v1209 = vadd.f32 0.0, %v1208
        %v1210 = vpop.f32.mrb[0].mxu0
        %v1211 = vpop.f32.mrb[0].mxu0
        %v1212 = vadd.f32 0.0, %v1211
        %v1213 = vpop.f32.mrb[0].mxu0
        %1214 = vdwg.mxu0
        %v1215 = vadd.f32 %v865, %v1209
        %v1216 = vadd.f32 %v866, %v1212
        %v1217 = vsel %vm887, %v1215, 0.0
        %1218 = vadd.xlane.f32.xlu0 %v1217
        %v1219 = vpop.xlane.xlu0 %1218
        %v1220 = vsel %vm887, %v1216, 0.0
        %1221 = vadd.xlane.f32.xlu0 %v1220
        %v1222 = vpop.xlane.xlu0 %1221
        %v1223 = vrcp.pop 32.0
        %v1224 = vmul.f32 %v1219, %v1223
        %v1225 = vmul.f32 %v1222, %v1223
        %v1226 = vsub.f32 %v1215, %v1224
        %v1227 = vsub.f32 %v1216, %v1225
        %v1228 = vmul.f32 %v1226, %v1226
        %v1229 = vmul.f32 %v1227, %v1227
        %v1230 = vsel %vm887, %v1228, 0.0
        %1231 = vadd.xlane.f32.xlu0 %v1230
        %v1232 = vpop.xlane.xlu0 %1231
        %v1233 = vsel %vm887, %v1229, 0.0
        %1234 = vadd.xlane.f32.xlu0 %v1233
        %v1235 = vpop.xlane.xlu0 %1234
        %v1236 = vmul.f32 %v1232, %v1223
        %v1237 = vmul.f32 %v1235, %v1223
        %v1238 = vadd.f32 %v1236, 1e-05
        %v1239 = vadd.f32 %v1237, 1e-05
        %v1240 = vrsqrt.pop %v1238
        %v1241 = vrsqrt.pop %v1239
        %v1242 = vmul.f32 %v1226, %v1240
        %v1243 = vmul.f32 %v1227, %v1241
        %v1244 = vlaneseq
        %v1245 = vshrl.u32 %v1244, 7
        %v1246 = vsub.s32 0, %v1245
        %v1247 = vrot.slane %v869, %v1246
        %v1248 = vmul.f32 %v1242, %v1247
        %v1249 = vmul.f32 %v1243, %v1247
        %v1250 = vlaneseq
        %v1251 = vshrl.u32 %v1250, 7
        %v1252 = vsub.s32 1, %v1251
        %v1253 = vrot.slane %v869, %v1252
        %v1254 = vadd.f32 %v1248, %v1253
        %v1255 = vadd.f32 %v1249, %v1253
        %v1256 = vpack.c.bf16 %v1255, %v1254
        %s1257 = scalar_lea.vmem %s711, 16 [#allocation9]
        %v1258 = vld [vmem:[%s1257] sm:$0xf]
        %v1259 = vld [vmem:[%s1257 + $0x4] sm:$0xf]
        %v1260 = vld [vmem:[%s1257 + $0x8] sm:$0xf]
        %v1261 = vld [vmem:[%s1257 + $0xc] sm:$0xf]
        %v1266 = vunpack.c.l.b16 %v1258
        %v1267 = vunpack.c.l.b16 %v1259
        %v1268 = vunpack.c.l.b16 %v1260
        %v1269 = vunpack.c.l.b16 %v1261
        %v1270 = vpack.c.b16 %v1267, %v1266
        %v1271 = vpack.c.b16 %v1269, %v1268
        %v1275 = vsel %vm887, %v1256, 0
        %1277 = vmatprep.subr.bf16.mxu0 0
        %1278 = vmatpush1.bf16.msra.mxu0 %v1270
        %1279 = vmatprep.subr.bf16.mxu0 0
        %1280 = vmatpush1.bf16.msra.mxu0 %v1271
        %1281 = vmatprep.subr.bf16.mxu0 0
        %1282 = vmatpush1.bf16.msra.mxu0 0
        %1283 = vmatprep.subr.bf16.mxu0 0
        %1284 = vmatpush1.bf16.msra.mxu0 0
        %1285 = vmatprep.subr.bf16.mxu0 0
        %1286 = vmatpush1.bf16.msra.mxu0 0
        %1287 = vmatprep.subr.bf16.mxu0 0
        %1288 = vmatpush1.bf16.msra.mxu0 0
        %1289 = vmatprep.subr.bf16.mxu0 0
        %1290 = vmatpush1.bf16.msra.mxu0 0
        %1291 = vmatprep.subr.bf16.mxu0 0
        %1292 = vmatpush1.bf16.msra.mxu0 0
        %1293 = vmatprep.subr.bf16.mxu0 0
        %1294 = vmatpush1.bf16.msra.mxu0 0
        %1295 = vmatprep.subr.bf16.mxu0 0
        %1296 = vmatpush1.bf16.msra.mxu0 0
        %1297 = vmatprep.subr.bf16.mxu0 0
        %1298 = vmatpush1.bf16.msra.mxu0 0
        %1299 = vmatprep.subr.bf16.mxu0 0
        %1300 = vmatpush1.bf16.msra.mxu0 0
        %1301 = vmatprep.subr.bf16.mxu0 0
        %1302 = vmatpush1.bf16.msra.mxu0 0
        %1303 = vmatprep.subr.bf16.mxu0 0
        %1304 = vmatpush1.bf16.msra.mxu0 0
        %1305 = vmatprep.subr.bf16.mxu0 0
        %1306 = vmatpush1.bf16.msra.mxu0 0
        %1307 = vmatprep.subr.bf16.mxu0 0
        %1308 = vmatpush1.bf16.msra.mxu0 0
        %1309 = vmatprep.mubr.bf16.mxu0 0
        %1310 = vmatmul.mubr.bf16.gmra.mrb[0].mxu0 %v1275
        %v1311 = vpop.f32.mrb[0].mxu0
        %v1312 = vadd.f32 0.0, %v1311
        %v1313 = vpop.f32.mrb[0].mxu0
        %v1314 = vpop.f32.mrb[0].mxu0
        %v1315 = vadd.f32 0.0, %v1314
        %v1316 = vpop.f32.mrb[0].mxu0
        %1317 = vdwg.mxu0
        %v1318 = vpack.c.bf16 %v1312, %v1312
        %v1319 = vpack.c.bf16 %v1315, %v1315
        %v1320 = vld [vmem:[%s720] sm:$0xf]
        %v1321 = vld [vmem:[%s720 + $0x4] sm:$0xf]
        %v1322 = vld [vmem:[%s720 + $0x8] sm:$0xf]
        %v1323 = vld [vmem:[%s720 + $0xc] sm:$0xf]
        %v1326 = vunpack.c.l.b16 %v867
        %v1327 = vunpack.c.l.b16 %v868
        %v1328 = vpack.c.b16 %v1327, %v1326
        %v1333 = vunpack.c.l.b16 %v1320
        %v1334 = vunpack.c.l.b16 %v1321
        %v1335 = vunpack.c.l.b16 %v1322
        %v1336 = vunpack.c.l.b16 %v1323
        %v1337 = vpack.c.b16 %v1334, %v1333
        %v1338 = vpack.c.b16 %v1336, %v1335
        %v1342 = vsel %vm887, %v1328, 0
        %1344 = vmatprep.subr.bf16.mxu0 0
        %1345 = vmatpush1.bf16.msra.mxu0 %v1337
        %1346 = vmatprep.subr.bf16.mxu0 0
        %1347 = vmatpush1.bf16.msra.mxu0 %v1338
        %1348 = vmatprep.subr.bf16.mxu0 0
        %1349 = vmatpush1.bf16.msra.mxu0 0
        %1350 = vmatprep.subr.bf16.mxu0 0
        %1351 = vmatpush1.bf16.msra.mxu0 0
        %1352 = vmatprep.subr.bf16.mxu0 0
        %1353 = vmatpush1.bf16.msra.mxu0 0
        %1354 = vmatprep.subr.bf16.mxu0 0
        %1355 = vmatpush1.bf16.msra.mxu0 0
        %1356 = vmatprep.subr.bf16.mxu0 0
        %1357 = vmatpush1.bf16.msra.mxu0 0
        %1358 = vmatprep.subr.bf16.mxu0 0
        %1359 = vmatpush1.bf16.msra.mxu0 0
        %1360 = vmatprep.subr.bf16.mxu0 0
        %1361 = vmatpush1.bf16.msra.mxu0 0
        %1362 = vmatprep.subr.bf16.mxu0 0
        %1363 = vmatpush1.bf16.msra.mxu0 0
        %1364 = vmatprep.subr.bf16.mxu0 0
        %1365 = vmatpush1.bf16.msra.mxu0 0
        %1366 = vmatprep.subr.bf16.mxu0 0
        %1367 = vmatpush1.bf16.msra.mxu0 0
        %1368 = vmatprep.subr.bf16.mxu0 0
        %1369 = vmatpush1.bf16.msra.mxu0 0
        %1370 = vmatprep.subr.bf16.mxu0 0
        %1371 = vmatpush1.bf16.msra.mxu0 0
        %1372 = vmatprep.subr.bf16.mxu0 0
        %1373 = vmatpush1.bf16.msra.mxu0 0
        %1374 = vmatprep.subr.bf16.mxu0 0
        %1375 = vmatpush1.bf16.msra.mxu0 0
        %1376 = vmatprep.mubr.bf16.mxu0 0
        %1377 = vmatmul.mubr.bf16.gmra.mrb[0].mxu0 %v1342
        %v1378 = vpop.f32.mrb[0].mxu0
        %v1379 = vadd.f32 0.0, %v1378
        %v1380 = vpop.f32.mrb[0].mxu0
        %v1381 = vpop.f32.mrb[0].mxu0
        %v1382 = vadd.f32 0.0, %v1381
        %v1383 = vpop.f32.mrb[0].mxu0
        %1384 = vdwg.mxu0
        %v1385 = vpack.c.bf16 %v1379, %v1379
        %v1386 = vpack.c.bf16 %v1382, %v1382
        %v1388 = vsel %vm887, %v1318, 0
        %v1391 = vsel %vm887, %v1385, 0
        %1393 = vmatprep.subr.bf16.mxu0 0
        %1394 = vmatpush1.bf16.xpose.msra.mxu0 %v1391
        %1395 = vmatprep.subr.bf16.mxu0 0
        %1396 = vmatpush1.bf16.xpose.msra.mxu0 0
        %1397 = vmatprep.subr.bf16.mxu0 0
        %1398 = vmatpush1.bf16.xpose.msra.mxu0 0
        %1399 = vmatprep.subr.bf16.mxu0 0
        %1400 = vmatpush1.bf16.xpose.msra.mxu0 0
        %1401 = vmatprep.subr.bf16.mxu0 0
        %1402 = vmatpush1.bf16.xpose.msra.mxu0 0
        %1403 = vmatprep.subr.bf16.mxu0 0
        %1404 = vmatpush1.bf16.xpose.msra.mxu0 0
        %1405 = vmatprep.subr.bf16.mxu0 0
        %1406 = vmatpush1.bf16.xpose.msra.mxu0 0
        %1407 = vmatprep.subr.bf16.mxu0 0
        %1408 = vmatpush1.bf16.xpose.msra.mxu0 0
        %1409 = vmatprep.subr.bf16.mxu0 0
        %1410 = vmatpush1.bf16.xpose.msra.mxu0 0
        %1411 = vmatprep.subr.bf16.mxu0 0
        %1412 = vmatpush1.bf16.xpose.msra.mxu0 0
        %1413 = vmatprep.subr.bf16.mxu0 0
        %1414 = vmatpush1.bf16.xpose.msra.mxu0 0
        %1415 = vmatprep.subr.bf16.mxu0 0
        %1416 = vmatpush1.bf16.xpose.msra.mxu0 0
        %1417 = vmatprep.subr.bf16.mxu0 0
        %1418 = vmatpush1.bf16.xpose.msra.mxu0 0
        %1419 = vmatprep.subr.bf16.mxu0 0
        %1420 = vmatpush1.bf16.xpose.msra.mxu0 0
        %1421 = vmatprep.subr.bf16.mxu0 0
        %1422 = vmatpush1.bf16.xpose.msra.mxu0 0
        %1423 = vmatprep.subr.bf16.mxu0 0
        %1424 = vmatpush1.bf16.xpose.msra.mxu0 0
        %1425 = vmatprep.mubr.bf16.mxu0 0
        %1426 = vmatmul.mubr.bf16.gmra.mrb[0].mxu0 %v1388
        %v1427 = vpop.f32.mrb[0].mxu0
        %v1428 = vadd.f32 0.0, %v1427
        %v1429 = vpop.f32.mrb[0].mxu0
        %v1430 = vpop.f32.mrb[0].mxu0
        %v1431 = vpop.f32.mrb[0].mxu0
        %1432 = vdwg.mxu0
        %v1434 = vsel %vm887, %v1319, 0
        %v1437 = vsel %vm887, %v1386, 0
        %1439 = vmatprep.subr.bf16.mxu0 0
        %1440 = vmatpush1.bf16.xpose.msra.mxu0 %v1437
        %1441 = vmatprep.subr.bf16.mxu0 0
        %1442 = vmatpush1.bf16.xpose.msra.mxu0 0
        %1443 = vmatprep.subr.bf16.mxu0 0
        %1444 = vmatpush1.bf16.xpose.msra.mxu0 0
        %1445 = vmatprep.subr.bf16.mxu0 0
        %1446 = vmatpush1.bf16.xpose.msra.mxu0 0
        %1447 = vmatprep.subr.bf16.mxu0 0
        %1448 = vmatpush1.bf16.xpose.msra.mxu0 0
        %1449 = vmatprep.subr.bf16.mxu0 0
        %1450 = vmatpush1.bf16.xpose.msra.mxu0 0
        %1451 = vmatprep.subr.bf16.mxu0 0
        %1452 = vmatpush1.bf16.xpose.msra.mxu0 0
        %1453 = vmatprep.subr.bf16.mxu0 0
        %1454 = vmatpush1.bf16.xpose.msra.mxu0 0
        %1455 = vmatprep.subr.bf16.mxu0 0
        %1456 = vmatpush1.bf16.xpose.msra.mxu0 0
        %1457 = vmatprep.subr.bf16.mxu0 0
        %1458 = vmatpush1.bf16.xpose.msra.mxu0 0
        %1459 = vmatprep.subr.bf16.mxu0 0
        %1460 = vmatpush1.bf16.xpose.msra.mxu0 0
        %1461 = vmatprep.subr.bf16.mxu0 0
        %1462 = vmatpush1.bf16.xpose.msra.mxu0 0
        %1463 = vmatprep.subr.bf16.mxu0 0
        %1464 = vmatpush1.bf16.xpose.msra.mxu0 0
        %1465 = vmatprep.subr.bf16.mxu0 0
        %1466 = vmatpush1.bf16.xpose.msra.mxu0 0
        %1467 = vmatprep.subr.bf16.mxu0 0
        %1468 = vmatpush1.bf16.xpose.msra.mxu0 0
        %1469 = vmatprep.subr.bf16.mxu0 0
        %1470 = vmatpush1.bf16.xpose.msra.mxu0 0
        %1471 = vmatprep.mubr.bf16.mxu0 0
        %1472 = vmatmul.mubr.bf16.gmra.mrb[0].mxu0 %v1434
        %v1473 = vpop.f32.mrb[0].mxu0
        %v1474 = vadd.f32 0.0, %v1473
        %v1475 = vpop.f32.mrb[0].mxu0
        %v1476 = vpop.f32.mrb[0].mxu0
        %v1477 = vpop.f32.mrb[0].mxu0
        %1478 = vdwg.mxu0
        %v1479 = vsel %vm1032, %v1428, -inf
        %1480 = vmax.xlane.f32.xlu0 %v1479
        %v1481 = vpop.xlane.xlu0 %1480
        %v1482 = vsel %vm1032, %v1474, -inf
        %1483 = vmax.xlane.f32.xlu0 %v1482
        %v1484 = vpop.xlane.xlu0 %1483
        %v1485 = vsub.f32 %v1428, %v1481
        %v1486 = vsub.f32 %v1474, %v1484
        %v1487 = vmul.f32 %v1485, 1.442695
        %v1488 = vpow.pop %v1487
        %v1489 = vmul.f32 %v1486, 1.442695
        %v1490 = vpow.pop %v1489
        %v1491 = vsel %vm1032, %v1488, 0.0
        %1492 = vadd.xlane.f32.xlu0 %v1491
        %v1493 = vpop.xlane.xlu0 %1492
        %v1494 = vsel %vm1032, %v1490, 0.0
        %1495 = vadd.xlane.f32.xlu0 %v1494
        %v1496 = vpop.xlane.xlu0 %1495
        %v1497 = vrcp.pop %v1493
        %v1498 = vrcp.pop %v1496
        %v1499 = vmul.f32 %v1488, %v1497
        %v1500 = vmul.f32 %v1490, %v1498
        %v1501 = vpack.c.bf16 %v1499, %v1499
        %v1502 = vpack.c.bf16 %v1500, %v1500
        %1504 = vrot.lane.b32.xlu0 %v1385, 96
        %v1505 = vpop.permute.xlu0 %1504
        %v1507 = vsel %vm1032, %v1501, 0
        %v1510 = vsel %vm1062, %v1505, 0
        %1512 = vmatprep.subr.bf16.mxu0 0
        %1513 = vmatpush1.bf16.msra.mxu0 %v1510
        %1514 = vmatprep.subr.bf16.mxu0 0
        %1515 = vmatpush1.bf16.msra.mxu0 0
        %1516 = vmatprep.subr.bf16.mxu0 0
        %1517 = vmatpush1.bf16.msra.mxu0 0
        %1518 = vmatprep.subr.bf16.mxu0 0
        %1519 = vmatpush1.bf16.msra.mxu0 0
        %1520 = vmatprep.subr.bf16.mxu0 0
        %1521 = vmatpush1.bf16.msra.mxu0 0
        %1522 = vmatprep.subr.bf16.mxu0 0
        %1523 = vmatpush1.bf16.msra.mxu0 0
        %1524 = vmatprep.subr.bf16.mxu0 0
        %1525 = vmatpush1.bf16.msra.mxu0 0
        %1526 = vmatprep.subr.bf16.mxu0 0
        %1527 = vmatpush1.bf16.msra.mxu0 0
        %1528 = vmatprep.subr.bf16.mxu0 0
        %1529 = vmatpush1.bf16.msra.mxu0 0
        %1530 = vmatprep.subr.bf16.mxu0 0
        %1531 = vmatpush1.bf16.msra.mxu0 0
        %1532 = vmatprep.subr.bf16.mxu0 0
        %1533 = vmatpush1.bf16.msra.mxu0 0
        %1534 = vmatprep.subr.bf16.mxu0 0
        %1535 = vmatpush1.bf16.msra.mxu0 0
        %1536 = vmatprep.subr.bf16.mxu0 0
        %1537 = vmatpush1.bf16.msra.mxu0 0
        %1538 = vmatprep.subr.bf16.mxu0 0
        %1539 = vmatpush1.bf16.msra.mxu0 0
        %1540 = vmatprep.subr.bf16.mxu0 0
        %1541 = vmatpush1.bf16.msra.mxu0 0
        %1542 = vmatprep.subr.bf16.mxu0 0
        %1543 = vmatpush1.bf16.msra.mxu0 0
        %1544 = vmatprep.mubr.bf16.mxu0 0
        %1545 = vmatmul.mubr.bf16.gmra.mrb[0].mxu0 %v1507
        %v1546 = vpop.f32.mrb[0].mxu0
        %v1547 = vadd.f32 0.0, %v1546
        %v1548 = vpop.f32.mrb[0].mxu0
        %v1549 = vpop.f32.mrb[0].mxu0
        %v1550 = vpop.f32.mrb[0].mxu0
        %1551 = vdwg.mxu0
        %1553 = vrot.lane.b32.xlu0 %v1386, 96
        %v1554 = vpop.permute.xlu0 %1553
        %v1556 = vsel %vm1032, %v1502, 0
        %v1559 = vsel %vm1062, %v1554, 0
        %1561 = vmatprep.subr.bf16.mxu0 0
        %1562 = vmatpush1.bf16.msra.mxu0 %v1559
        %1563 = vmatprep.subr.bf16.mxu0 0
        %1564 = vmatpush1.bf16.msra.mxu0 0
        %1565 = vmatprep.subr.bf16.mxu0 0
        %1566 = vmatpush1.bf16.msra.mxu0 0
        %1567 = vmatprep.subr.bf16.mxu0 0
        %1568 = vmatpush1.bf16.msra.mxu0 0
        %1569 = vmatprep.subr.bf16.mxu0 0
        %1570 = vmatpush1.bf16.msra.mxu0 0
        %1571 = vmatprep.subr.bf16.mxu0 0
        %1572 = vmatpush1.bf16.msra.mxu0 0
        %1573 = vmatprep.subr.bf16.mxu0 0
        %1574 = vmatpush1.bf16.msra.mxu0 0
        %1575 = vmatprep.subr.bf16.mxu0 0
        %1576 = vmatpush1.bf16.msra.mxu0 0
        %1577 = vmatprep.subr.bf16.mxu0 0
        %1578 = vmatpush1.bf16.msra.mxu0 0
        %1579 = vmatprep.subr.bf16.mxu0 0
        %1580 = vmatpush1.bf16.msra.mxu0 0
        %1581 = vmatprep.subr.bf16.mxu0 0
        %1582 = vmatpush1.bf16.msra.mxu0 0
        %1583 = vmatprep.subr.bf16.mxu0 0
        %1584 = vmatpush1.bf16.msra.mxu0 0
        %1585 = vmatprep.subr.bf16.mxu0 0
        %1586 = vmatpush1.bf16.msra.mxu0 0
        %1587 = vmatprep.subr.bf16.mxu0 0
        %1588 = vmatpush1.bf16.msra.mxu0 0
        %1589 = vmatprep.subr.bf16.mxu0 0
        %1590 = vmatpush1.bf16.msra.mxu0 0
        %1591 = vmatprep.subr.bf16.mxu0 0
        %1592 = vmatpush1.bf16.msra.mxu0 0
        %1593 = vmatprep.mubr.bf16.mxu0 0
        %1594 = vmatmul.mubr.bf16.gmra.mrb[0].mxu0 %v1556
        %v1595 = vpop.f32.mrb[0].mxu0
        %v1596 = vadd.f32 0.0, %v1595
        %v1597 = vpop.f32.mrb[0].mxu0
        %v1598 = vpop.f32.mrb[0].mxu0
        %v1599 = vpop.f32.mrb[0].mxu0
        %1600 = vdwg.mxu0
        %v1601 = vpack.c.bf16 %v1596, %v1547
        %s1602 = scalar_lea.vmem %s711, 32 [#allocation9]
        %v1603 = vld [vmem:[%s1602] sm:$0xf]
        %v1604 = vld [vmem:[%s1602 + $0x4] sm:$0xf]
        %v1605 = vld [vmem:[%s1602 + $0x8] sm:$0xf]
        %v1606 = vld [vmem:[%s1602 + $0xc] sm:$0xf]
        %v1611 = vunpack.c.l.b16 %v1603
        %v1612 = vunpack.c.l.b16 %v1604
        %v1613 = vunpack.c.l.b16 %v1605
        %v1614 = vunpack.c.l.b16 %v1606
        %v1615 = vpack.c.b16 %v1612, %v1611
        %v1616 = vpack.c.b16 %v1614, %v1613
        %v1620 = vsel %vm887, %v1601, 0
        %1622 = vmatprep.subr.bf16.mxu0 0
        %1623 = vmatpush1.bf16.msra.mxu0 %v1615
        %1624 = vmatprep.subr.bf16.mxu0 0
        %1625 = vmatpush1.bf16.msra.mxu0 %v1616
        %1626 = vmatprep.subr.bf16.mxu0 0
        %1627 = vmatpush1.bf16.msra.mxu0 0
        %1628 = vmatprep.subr.bf16.mxu0 0
        %1629 = vmatpush1.bf16.msra.mxu0 0
        %1630 = vmatprep.subr.bf16.mxu0 0
        %1631 = vmatpush1.bf16.msra.mxu0 0
        %1632 = vmatprep.subr.bf16.mxu0 0
        %1633 = vmatpush1.bf16.msra.mxu0 0
        %1634 = vmatprep.subr.bf16.mxu0 0
        %1635 = vmatpush1.bf16.msra.mxu0 0
        %1636 = vmatprep.subr.bf16.mxu0 0
        %1637 = vmatpush1.bf16.msra.mxu0 0
        %1638 = vmatprep.subr.bf16.mxu0 0
        %1639 = vmatpush1.bf16.msra.mxu0 0
        %1640 = vmatprep.subr.bf16.mxu0 0
        %1641 = vmatpush1.bf16.msra.mxu0 0
        %1642 = vmatprep.subr.bf16.mxu0 0
        %1643 = vmatpush1.bf16.msra.mxu0 0
        %1644 = vmatprep.subr.bf16.mxu0 0
        %1645 = vmatpush1.bf16.msra.mxu0 0
        %1646 = vmatprep.subr.bf16.mxu0 0
        %1647 = vmatpush1.bf16.msra.mxu0 0
        %1648 = vmatprep.subr.bf16.mxu0 0
        %1649 = vmatpush1.bf16.msra.mxu0 0
        %1650 = vmatprep.subr.bf16.mxu0 0
        %1651 = vmatpush1.bf16.msra.mxu0 0
        %1652 = vmatprep.subr.bf16.mxu0 0
        %1653 = vmatpush1.bf16.msra.mxu0 0
        %1654 = vmatprep.mubr.bf16.mxu0 0
        %1655 = vmatmul.mubr.bf16.gmra.mrb[0].mxu0 %v1620
        %v1656 = vpop.f32.mrb[0].mxu0
        %v1657 = vadd.f32 0.0, %v1656
        %v1658 = vpop.f32.mrb[0].mxu0
        %v1659 = vpop.f32.mrb[0].mxu0
        %v1660 = vadd.f32 0.0, %v1659
        %v1661 = vpop.f32.mrb[0].mxu0
        %1662 = vdwg.mxu0
        %v1663 = vadd.f32 %v1254, %v1657
        %v1664 = vadd.f32 %v1255, %v1660
        %v1665 = vsel %vm887, %v1663, 0.0
        %1666 = vadd.xlane.f32.xlu0 %v1665
        %v1667 = vpop.xlane.xlu0 %1666
        %v1668 = vsel %vm887, %v1664, 0.0
        %1669 = vadd.xlane.f32.xlu0 %v1668
        %v1670 = vpop.xlane.xlu0 %1669
        %v1671 = vmul.f32 %v1667, %v1223
        %v1672 = vmul.f32 %v1670, %v1223
        %v1673 = vsub.f32 %v1663, %v1671
        %v1674 = vsub.f32 %v1664, %v1672
        %v1675 = vmul.f32 %v1673, %v1673
        %v1676 = vmul.f32 %v1674, %v1674
        %v1677 = vsel %vm887, %v1675, 0.0
        %1678 = vadd.xlane.f32.xlu0 %v1677
        %v1679 = vpop.xlane.xlu0 %1678
        %v1680 = vsel %vm887, %v1676, 0.0
        %1681 = vadd.xlane.f32.xlu0 %v1680
        %v1682 = vpop.xlane.xlu0 %1681
        %v1683 = vmul.f32 %v1679, %v1223
        %v1684 = vmul.f32 %v1682, %v1223
        %v1685 = vadd.f32 %v1683, 1e-05
        %v1686 = vadd.f32 %v1684, 1e-05
        %v1687 = vrsqrt.pop %v1685
        %v1688 = vrsqrt.pop %v1686
        %v1689 = vmul.f32 %v1673, %v1687
        %v1690 = vmul.f32 %v1674, %v1688
        %v1691 = vlaneseq
        %v1692 = vshrl.u32 %v1691, 7
        %v1693 = vsub.s32 2, %v1692
        %v1694 = vrot.slane %v869, %v1693
        %v1695 = vmul.f32 %v1689, %v1694
        %v1696 = vmul.f32 %v1690, %v1694
        %v1697 = vlaneseq
        %v1698 = vshrl.u32 %v1697, 7
        %v1699 = vsub.s32 3, %v1698
        %v1700 = vrot.slane %v869, %v1699
        %v1701 = vadd.f32 %v1695, %v1700
        %v1702 = vadd.f32 %v1696, %v1700
        %v1703 = vpack.c.bf16 %v1702, %v1701
        %v1704 = vld [vmem:[%s729] sm:$0xf]
        %v1705 = vld [vmem:[%s729 + $0x4] sm:$0xf]
        %v1706 = vld [vmem:[%s729 + $0x8] sm:$0xf]
        %v1707 = vld [vmem:[%s729 + $0xc] sm:$0xf]
        %v1708 = vld [vmem:[%s737] sm:$0x1]
        %v1710 = vlaneseq
        %v1711 = vshrl.u32 %v1710, 7
        %v1712 = vsub.s32 0, %v1711
        %v1713 = vrot.slane %v1708, %v1712
        %v1719 = vunpack.c.l.b16 %v1704
        %v1720 = vunpack.c.l.b16 %v1705
        %v1721 = vunpack.c.l.b16 %v1706
        %v1722 = vunpack.c.l.b16 %v1707
        %v1723 = vpack.c.b16 %v1720, %v1719
        %v1724 = vpack.c.b16 %v1722, %v1721
        %v1728 = vsel %vm887, %v1703, 0
        %1730 = vmatprep.subr.bf16.mxu0 0
        %1731 = vmatpush1.bf16.msra.mxu0 %v1723
        %1732 = vmatprep.subr.bf16.mxu0 0
        %1733 = vmatpush1.bf16.msra.mxu0 %v1724
        %1734 = vmatprep.subr.bf16.mxu0 0
        %1735 = vmatpush1.bf16.msra.mxu0 0
        %1736 = vmatprep.subr.bf16.mxu0 0
        %1737 = vmatpush1.bf16.msra.mxu0 0
        %1738 = vmatprep.subr.bf16.mxu0 0
        %1739 = vmatpush1.bf16.msra.mxu0 0
        %1740 = vmatprep.subr.bf16.mxu0 0
        %1741 = vmatpush1.bf16.msra.mxu0 0
        %1742 = vmatprep.subr.bf16.mxu0 0
        %1743 = vmatpush1.bf16.msra.mxu0 0
        %1744 = vmatprep.subr.bf16.mxu0 0
        %1745 = vmatpush1.bf16.msra.mxu0 0
        %1746 = vmatprep.subr.bf16.mxu0 0
        %1747 = vmatpush1.bf16.msra.mxu0 0
        %1748 = vmatprep.subr.bf16.mxu0 0
        %1749 = vmatpush1.bf16.msra.mxu0 0
        %1750 = vmatprep.subr.bf16.mxu0 0
        %1751 = vmatpush1.bf16.msra.mxu0 0
        %1752 = vmatprep.subr.bf16.mxu0 0
        %1753 = vmatpush1.bf16.msra.mxu0 0
        %1754 = vmatprep.subr.bf16.mxu0 0
        %1755 = vmatpush1.bf16.msra.mxu0 0
        %1756 = vmatprep.subr.bf16.mxu0 0
        %1757 = vmatpush1.bf16.msra.mxu0 0
        %1758 = vmatprep.subr.bf16.mxu0 0
        %1759 = vmatpush1.bf16.msra.mxu0 0
        %1760 = vmatprep.subr.bf16.mxu0 0
        %1761 = vmatpush1.bf16.msra.mxu0 0
        %1762 = vmatprep.mubr.bf16.mxu0 0
        %1763 = vmatmul.mubr.bf16.gmra.mrb[0].mxu0 %v1728
        %v1764 = vpop.f32.mrb[0].mxu0
        %v1765 = vadd.f32 %v1713, %v1764
        %v1766 = vpop.f32.mrb[0].mxu0
        %v1767 = vpop.f32.mrb[0].mxu0
        %v1768 = vadd.f32 %v1713, %v1767
        %v1769 = vpop.f32.mrb[0].mxu0
        %1770 = vdwg.mxu0
        %v1771 = vmax.f32 %v1765, 0.0
        %v1772 = vmax.f32 %v1768, 0.0
        %v1773 = vpack.c.bf16 %v1772, %v1771
        %v1774 = vld [vmem:[%s746] sm:$0xf]
        %v1775 = vld [vmem:[%s746 + $0x4] sm:$0xf]
        %v1776 = vld [vmem:[%s746 + $0x8] sm:$0xf]
        %v1777 = vld [vmem:[%s746 + $0xc] sm:$0xf]
        %v1778 = vld [vmem:[%s746 + $0x10] sm:$0xf]
        %v1779 = vld [vmem:[%s746 + $0x14] sm:$0xf]
        %v1780 = vld [vmem:[%s746 + $0x18] sm:$0xf]
        %v1781 = vld [vmem:[%s746 + $0x1c] sm:$0xf]
        %v1790 = vunpack.c.l.b16 %v1774
        %v1791 = vunpack.c.l.b16 %v1775
        %v1792 = vunpack.c.l.b16 %v1776
        %v1793 = vunpack.c.l.b16 %v1777
        %v1794 = vunpack.c.l.b16 %v1778
        %v1795 = vunpack.c.l.b16 %v1779
        %v1796 = vunpack.c.l.b16 %v1780
        %v1797 = vunpack.c.l.b16 %v1781
        %v1798 = vpack.c.b16 %v1791, %v1790
        %v1799 = vpack.c.b16 %v1793, %v1792
        %v1800 = vpack.c.b16 %v1795, %v1794
        %v1801 = vpack.c.b16 %v1797, %v1796
        %vm1806 = vcmask 523264
        %v1808 = vsel %vm1806, %v1773, 0
        %1810 = vmatprep.subr.bf16.mxu0 0
        %1811 = vmatpush1.bf16.msra.mxu0 %v1798
        %1812 = vmatprep.subr.bf16.mxu0 0
        %1813 = vmatpush1.bf16.msra.mxu0 %v1799
        %1814 = vmatprep.subr.bf16.mxu0 0
        %1815 = vmatpush1.bf16.msra.mxu0 %v1800
        %1816 = vmatprep.subr.bf16.mxu0 0
        %1817 = vmatpush1.bf16.msra.mxu0 %v1801
        %1818 = vmatprep.subr.bf16.mxu0 0
        %1819 = vmatpush1.bf16.msra.mxu0 0
        %1820 = vmatprep.subr.bf16.mxu0 0
        %1821 = vmatpush1.bf16.msra.mxu0 0
        %1822 = vmatprep.subr.bf16.mxu0 0
        %1823 = vmatpush1.bf16.msra.mxu0 0
        %1824 = vmatprep.subr.bf16.mxu0 0
        %1825 = vmatpush1.bf16.msra.mxu0 0
        %1826 = vmatprep.subr.bf16.mxu0 0
        %1827 = vmatpush1.bf16.msra.mxu0 0
        %1828 = vmatprep.subr.bf16.mxu0 0
        %1829 = vmatpush1.bf16.msra.mxu0 0
        %1830 = vmatprep.subr.bf16.mxu0 0
        %1831 = vmatpush1.bf16.msra.mxu0 0
        %1832 = vmatprep.subr.bf16.mxu0 0
        %1833 = vmatpush1.bf16.msra.mxu0 0
        %1834 = vmatprep.subr.bf16.mxu0 0
        %1835 = vmatpush1.bf16.msra.mxu0 0
        %1836 = vmatprep.subr.bf16.mxu0 0
        %1837 = vmatpush1.bf16.msra.mxu0 0
        %1838 = vmatprep.subr.bf16.mxu0 0
        %1839 = vmatpush1.bf16.msra.mxu0 0
        %1840 = vmatprep.subr.bf16.mxu0 0
        %1841 = vmatpush1.bf16.msra.mxu0 0
        %1842 = vmatprep.mubr.bf16.mxu0 0
        %1843 = vmatmul.mubr.bf16.gmra.mrb[0].mxu0 %v1808
        %v1844 = vpop.f32.mrb[0].mxu0
        %v1845 = vadd.f32 0.0, %v1844
        %v1846 = vpop.f32.mrb[0].mxu0
        %v1847 = vpop.f32.mrb[0].mxu0
        %v1848 = vadd.f32 0.0, %v1847
        %v1849 = vpop.f32.mrb[0].mxu0
        %1850 = vdwg.mxu0
        %v1851 = vadd.f32 %v1701, %v1845
        %v1852 = vadd.f32 %v1702, %v1848
        %v1853 = vld [vmem:[%s754] sm:$0x1]
        %v1855 = vlaneseq
        %v1856 = vshrl.u32 %v1855, 7
        %v1857 = vsub.s32 0, %v1856
        %v1858 = vrot.slane %v1853, %v1857
        %v1860 = vadd.f32 %v1851, %v1858
        %v1861 = vadd.f32 %v1852, %v1858
        %v1862 = vsel %vm887, %v1860, 0.0
        %1863 = vadd.xlane.f32.xlu0 %v1862
        %v1864 = vpop.xlane.xlu0 %1863
        %v1865 = vsel %vm887, %v1861, 0.0
        %1866 = vadd.xlane.f32.xlu0 %v1865
        %v1867 = vpop.xlane.xlu0 %1866
        %v1868 = vmul.f32 %v1864, %v1223
        %v1869 = vmul.f32 %v1867, %v1223
        %v1870 = vsub.f32 %v1860, %v1868
        %v1871 = vsub.f32 %v1861, %v1869
        %v1872 = vmul.f32 %v1870, %v1870
        %v1873 = vmul.f32 %v1871, %v1871
        %v1874 = vsel %vm887, %v1872, 0.0
        %1875 = vadd.xlane.f32.xlu0 %v1874
        %v1876 = vpop.xlane.xlu0 %1875
        %v1877 = vsel %vm887, %v1873, 0.0
        %1878 = vadd.xlane.f32.xlu0 %v1877
        %v1879 = vpop.xlane.xlu0 %1878
        %v1880 = vmul.f32 %v1876, %v1223
        %v1881 = vmul.f32 %v1879, %v1223
        %v1882 = vadd.f32 %v1880, 1e-05
        %v1883 = vadd.f32 %v1881, 1e-05
        %v1884 = vrsqrt.pop %v1882
        %v1885 = vrsqrt.pop %v1883
        %v1886 = vmul.f32 %v1870, %v1884
        %v1887 = vmul.f32 %v1871, %v1885
        %v1888 = vlaneseq
        %v1889 = vshrl.u32 %v1888, 7
        %v1890 = vsub.s32 4, %v1889
        %v1891 = vrot.slane %v869, %v1890
        %v1892 = vmul.f32 %v1886, %v1891
        %v1893 = vmul.f32 %v1887, %v1891
        %v1894 = vlaneseq
        %v1895 = vshrl.u32 %v1894, 7
        %v1896 = vsub.s32 5, %v1895
        %v1897 = vrot.slane %v869, %v1896
        %v1898 = vadd.f32 %v1892, %v1897
        %v1899 = vadd.f32 %v1893, %v1897
        %1900 = vst.msk [vmem:[#allocation2] sm:$0xff] %vm887, %v1898
        %1901 = vst.msk [vmem:[#allocation2 + $0x8] sm:$0xff] %vm887, %v1899
        %v1902 = vlaneseq
        %v1903 = vshrl.u32 %v1902, 7
        %v1904 = vmul.u32 %v1903, 128
        %v1905 = vlaneseq
        %v1906 = vand.u32 %v1905, 127
        %v1907 = vadd.s32 %v1904, %v1906
        %v1908 = vld [vmem:[#allocation21] sm:$0xff]
        %v1909 = vstv %s37
        %vm1910 = vcmp.eq.s32.totalorder %v1907, %v1909
        %v1911 = vmul.f32 %v1053, %v1053
        %v1912 = vmul.f32 %v1054, %v1054
        %v1913 = vsel %vm1032, %v1911, 0.0
        %v1914 = vsel %vm1032, %v1912, 0.0
        %v1915 = vadd.f32 %v1913, %v1914
        %1916 = vadd.xlane.f32.xlu0 %v1915
        %v1917 = vpop.xlane.xlu0 %1916
        %v1918 = vrot.slane %v1917, 4
        %v1919 = vadd.f32 %v1917, %v1918
        %v1920 = vrot.slane %v1919, 2
        %v1921 = vadd.f32 %v1919, %v1920
        %v1922 = vrot.slane %v1921, 1
        %v1923 = vadd.f32 %v1921, %v1922
        %s1924 = vtos %v1923
        %s1925 = smul.f32 %s1924, 0.0078125
        %v1926 = vstv %s1925
        %v1927 = vsel %vm1910, %v1926, 0.0
        %v1928 = vadd.f32 %v1908, %v1927
        %1929 = vst [vmem:[#allocation21] sm:$0xff] %v1928
        %v1930 = vld [vmem:[#allocation23] sm:$0xff]
        %v1931 = vmul.f32 %v1499, %v1499
        %v1932 = vmul.f32 %v1500, %v1500
        %v1933 = vsel %vm1032, %v1931, 0.0
        %v1934 = vsel %vm1032, %v1932, 0.0
        %v1935 = vadd.f32 %v1933, %v1934
        %1936 = vadd.xlane.f32.xlu0 %v1935
        %v1937 = vpop.xlane.xlu0 %1936
        %v1938 = vrot.slane %v1937, 4
        %v1939 = vadd.f32 %v1937, %v1938
        %v1940 = vrot.slane %v1939, 2
        %v1941 = vadd.f32 %v1939, %v1940
        %v1942 = vrot.slane %v1941, 1
        %v1943 = vadd.f32 %v1941, %v1942
        %s1944 = vtos %v1943
        %s1945 = smul.f32 %s1944, 0.0078125
        %v1946 = vstv %s1945
        %v1947 = vsel %vm1910, %v1946, 0.0
        %v1948 = vadd.f32 %v1930, %v1947
        %1949 = vst [vmem:[#allocation23] sm:$0xff] %v1948
        %p1950 = scmp.eq.s32.totalorder %s37, 1
        // Predicated region
        $region129: #{decoder_forward.1} parent=71 // pred_check
          %p1951 = pneg %p1950
        $region130: #{decoder_forward.1} parent=71 // pred_check_branch
          %1953 = sbr.rel (%p1951) target = $region132
        $region131: #{decoder_forward.1} parent=71 // pred_region
          %v1954 = vld [vmem:[#allocation16] sm:$0x3]
          %v1955 = vsel %vm887, %v1898, 0.0
          %1956 = vadd.xlane.f32.xlu0 %v1955
          %v1957 = vpop.xlane.xlu0 %1956
          %v1958 = vsel %vm887, %v1899, 0.0
          %1959 = vadd.xlane.f32.xlu0 %v1958
          %v1960 = vpop.xlane.xlu0 %1959
          %v1961 = vmul.f32 %v1957, %v1223
          %v1962 = vmul.f32 %v1960, %v1223
          %v1963 = vsub.f32 %v1898, %v1961
          %v1964 = vsub.f32 %v1899, %v1962
          %v1965 = vmul.f32 %v1963, %v1963
          %v1966 = vmul.f32 %v1964, %v1964
          %v1967 = vsel %vm887, %v1965, 0.0
          %1968 = vadd.xlane.f32.xlu0 %v1967
          %v1969 = vpop.xlane.xlu0 %1968
          %v1970 = vsel %vm887, %v1966, 0.0
          %1971 = vadd.xlane.f32.xlu0 %v1970
          %v1972 = vpop.xlane.xlu0 %1971
          %v1973 = vmul.f32 %v1969, %v1223
          %v1974 = vmul.f32 %v1972, %v1223
          %v1975 = vadd.f32 %v1973, 1e-05
          %v1976 = vadd.f32 %v1974, 1e-05
          %v1977 = vrsqrt.pop %v1975
          %v1978 = vrsqrt.pop %v1976
          %v1979 = vmul.f32 %v1963, %v1977
          %v1980 = vmul.f32 %v1964, %v1978
          %v1981 = vlaneseq
          %v1982 = vshrl.u32 %v1981, 7
          %v1983 = vsub.s32 0, %v1982
          %v1984 = vrot.slane %v1954, %v1983
          %v1985 = vmul.f32 %v1979, %v1984
          %v1986 = vmul.f32 %v1980, %v1984
          %v1987 = vlaneseq
          %v1988 = vshrl.u32 %v1987, 7
          %v1989 = vsub.s32 1, %v1988
          %v1990 = vrot.slane %v1954, %v1989
          %v1991 = vadd.f32 %v1985, %v1990
          %v1992 = vadd.f32 %v1986, %v1990
          %v1993 = vpack.c.bf16 %v1992, %v1991
          %v1994 = vld [vmem:[#allocation17] sm:$0xf]
          %v1995 = vld [vmem:[#allocation17 + $0x4] sm:$0xf]
          %v1996 = vld [vmem:[#allocation17 + $0x8] sm:$0xf]
          %v1997 = vld [vmem:[#allocation17 + $0xc] sm:$0xf]
          %v1998 = vld [vmem:[#allocation19] sm:$0x1]
          %v2000 = vlaneseq
          %v2001 = vshrl.u32 %v2000, 7
          %v2002 = vsub.s32 0, %v2001
          %v2003 = vrot.slane %v1998, %v2002
          %v2009 = vunpack.c.l.b16 %v1994
          %v2010 = vunpack.c.l.b16 %v1995
          %v2011 = vunpack.c.l.b16 %v1996
          %v2012 = vunpack.c.l.b16 %v1997
          %v2013 = vpack.c.b16 %v2010, %v2009
          %v2014 = vpack.c.b16 %v2012, %v2011
          %v2018 = vsel %vm887, %v1993, 0
          %2020 = vmatprep.subr.bf16.mxu0 0
          %2021 = vmatpush1.bf16.msra.mxu0 %v2013
          %2022 = vmatprep.subr.bf16.mxu0 0
          %2023 = vmatpush1.bf16.msra.mxu0 %v2014
          %2024 = vmatprep.subr.bf16.mxu0 0
          %2025 = vmatpush1.bf16.msra.mxu0 0
          %2026 = vmatprep.subr.bf16.mxu0 0
          %2027 = vmatpush1.bf16.msra.mxu0 0
          %2028 = vmatprep.subr.bf16.mxu0 0
          %2029 = vmatpush1.bf16.msra.mxu0 0
          %2030 = vmatprep.subr.bf16.mxu0 0
          %2031 = vmatpush1.bf16.msra.mxu0 0
          %2032 = vmatprep.subr.bf16.mxu0 0
          %2033 = vmatpush1.bf16.msra.mxu0 0
          %2034 = vmatprep.subr.bf16.mxu0 0
          %2035 = vmatpush1.bf16.msra.mxu0 0
          %2036 = vmatprep.subr.bf16.mxu0 0
          %2037 = vmatpush1.bf16.msra.mxu0 0
          %2038 = vmatprep.subr.bf16.mxu0 0
          %2039 = vmatpush1.bf16.msra.mxu0 0
          %2040 = vmatprep.subr.bf16.mxu0 0
          %2041 = vmatpush1.bf16.msra.mxu0 0
          %2042 = vmatprep.subr.bf16.mxu0 0
          %2043 = vmatpush1.bf16.msra.mxu0 0
          %2044 = vmatprep.subr.bf16.mxu0 0
          %2045 = vmatpush1.bf16.msra.mxu0 0
          %2046 = vmatprep.subr.bf16.mxu0 0
          %2047 = vmatpush1.bf16.msra.mxu0 0
          %2048 = vmatprep.subr.bf16.mxu0 0
          %2049 = vmatpush1.bf16.msra.mxu0 0
          %2050 = vmatprep.subr.bf16.mxu0 0
          %2051 = vmatpush1.bf16.msra.mxu0 0
          %2052 = vmatprep.mubr.bf16.mxu0 0
          %2053 = vmatmul.mubr.bf16.gmra.mrb[0].mxu0 %v2018
          %v2054 = vpop.f32.mrb[0].mxu0
          %v2055 = vadd.f32 %v2003, %v2054
          %v2056 = vpop.f32.mrb[0].mxu0
          %v2057 = vpop.f32.mrb[0].mxu0
          %v2058 = vadd.f32 %v2003, %v2057
          %v2059 = vpop.f32.mrb[0].mxu0
          %2060 = vdwg.mxu0
          %v2061 = vpack.c.bf16 %v2055, %v2055
          %v2062 = vpack.c.bf16 %v2058, %v2058
          %2063 = vst [vmem:[#allocation20] sm:$0xf] %v2061
          %2064 = vst [vmem:[#allocation20 + $0x4] sm:$0xf] %v2062
        $region132: #{decoder_forward.1} parent=71 // pred_fallthru
          _
        // Predicated region
        $region133: #{decoder_forward.1} parent=71 // pred_check
          %p2065 = pneg %p385
        $region134: #{decoder_forward.1} parent=71 // pred_check_branch
          %2067 = sbr.rel (%p2065) target = $region136
        $region135: #{decoder_forward.1} parent=71 // pred_region
          %s2068 = smul.u32 2, %s36
          %s2070 = ssub.s32 128, 128
          %2071 = vsyncadd [#allocation5], %s2070
          %s2072 = smul.addr %s2068, 64
          %s2073 = scalar_lea.hbm %s13, %s2072
          %s2074 = sshll.u32 [#allocation20], 4
          %s2075 = int_to_ptr.vmem [resolvable:$true] %s2074
          %2080 = dma.vmem_to_hbm [thread:$0]  %s2075, 128, %s2073, [#allocation5], 64, 64, 4
        $region136: #{decoder_forward.1} parent=71 // pred_fallthru
          _
        // Predicated region
        $region137: #{decoder_forward.1} parent=71 // pred_check
          %p2081 = pneg %p411
        $region138: #{decoder_forward.1} parent=71 // pred_check_branch
          %2083 = sbr.rel (%p2081) target = $region140
        $region139: #{decoder_forward.1} parent=71 // pred_region
          %s2085 = ssub.s32 128, 128
          %2086 = vsyncadd [#allocation22], %s2085
          %s2087 = smul.addr %s36, 128
          %s2088 = scalar_lea.hbm %s14, %s2087
          %s2090 = sshll.u32 [#allocation21], 4
          %s2091 = int_to_ptr.vmem [resolvable:$true] %s2090
          %2093 = dma.vmem_to_hbm [thread:$0]  %s2091, 128, %s2088, [#allocation22]
        $region140: #{decoder_forward.1} parent=71 // pred_fallthru
          _
        // Predicated region
        $region141: #{decoder_forward.1} parent=71 // pred_check
          %p2094 = pneg %p437
        $region142: #{decoder_forward.1} parent=71 // pred_check_branch
          %2096 = sbr.rel (%p2094) target = $region144
        $region143: #{decoder_forward.1} parent=71 // pred_region
          %s2098 = ssub.s32 128, 128
          %2099 = vsyncadd [#allocation22], %s2098
          %s2100 = smul.addr %s36, 128
          %s2101 = scalar_lea.hbm %s15, %s2100
          %s2103 = sshll.u32 [#allocation23], 4
          %s2104 = int_to_ptr.vmem [resolvable:$true] %s2103
          %2106 = dma.vmem_to_hbm [thread:$0]  %s2104, 128, %s2101, [#allocation22]
        $region144: #{decoder_forward.1} parent=71 // pred_fallthru
          _
        // Predicated region
        $region145: #{decoder_forward.1} parent=71 // pred_check
          %p2107 = pneg %p385
        $region146: #{decoder_forward.1} parent=71 // pred_check_branch
          %2109 = sbr.rel (%p2107) target = $region148
        $region147: #{decoder_forward.1} parent=71 // pred_region
          %2110 = dma.done [#allocation5], 128
        $region148: #{decoder_forward.1} parent=71 // pred_fallthru
          _
        // Predicated region
        $region149: #{decoder_forward.1} parent=71 // pred_check
          %p2111 = pneg %p411
        $region150: #{decoder_forward.1} parent=71 // pred_check_branch
          %2113 = sbr.rel (%p2111) target = $region152
        $region151: #{decoder_forward.1} parent=71 // pred_region
          %2114 = dma.done [#allocation22], 128
        $region152: #{decoder_forward.1} parent=71 // pred_fallthru
          _
        // Predicated region
        $region153: #{decoder_forward.1} parent=71 // pred_check
          %p2115 = pneg %p437
        $region154: #{decoder_forward.1} parent=71 // pred_check_branch
          %2117 = sbr.rel (%p2115) target = $region156
        $region155: #{decoder_forward.1} parent=71 // pred_region
          %2118 = dma.done [#allocation22], 128
        $region156: #{decoder_forward.1} parent=71 // pred_fallthru
          _
      $region72: #{decoder_forward.1} parent=5 // pred_fallthru
        _
      %p2119 = scmp.le.s32.totalorder 2, %s27
      // Predicated region
      $region157: #{decoder_forward.1} parent=5 // pred_check
        %p2120 = pneg %p2119
      $region158: #{decoder_forward.1} parent=5 // pred_check_branch
        %2122 = sbr.rel (%p2120) target = $region160
      $region159: #{decoder_forward.1} parent=5 // pred_region
        %s2123 = ssub.s32 %s27, 2
      $region160: #{decoder_forward.1} parent=5 // pred_fallthru
        _
    $region6: #{decoder_forward.1} parent=1 // loop_footer
      %s31 = sadd.s32 1, %s27
    $region7: #{decoder_forward.1} parent=1 // loop_footer_branch
      %26 = sbr.rel target = $region3
    $region8: #{decoder_forward.1} parent=1 // loop_exit
      _
    %2124 = vsyncpa [#allocation4], 1
    %s2125 = scalar_lea.sflag [#allocation4], 1
    %2126 = vsyncpa %s2125, 1
    %2127 = vsyncpa [#allocation7], 1
    %2128 = vsyncpa [#allocation18], 1
    %2129 = vsyncpa [#allocation5], 1
    %s2130 = scalar_lea.sflag [#allocation5], 1
    %2131 = vsyncpa %s2130, 1
    %2132 = vsyncpa [#allocation22], 1

</llo_original>
